<compile_context>
chip_gen: v6e
topology: v6e:2x2x1
jax: 0.10.0
libtpu: 0.0.40
codegen_flags: <defaults>
</compile_context>

<pallas_src>
import jax
import jax.numpy as jnp
from jax import lax
from jax.experimental import pallas as pl
from jax.experimental.pallas import tpu as pltpu


def _round_up(x, m):
    return (x + m - 1) // m * m


def gru_kernel(ig_ref, whh_ref, bhh_ref, out_ref, hfin_ref):
    S, Bp, _ = ig_ref.shape
    Hp = whh_ref.shape[0]

    whh = whh_ref[...]          # (Hp, 3*Hp) resident for the whole recurrence
    bhh = bhh_ref[...]          # (1, 3*Hp)

    def step(t, h):
        # one fused hidden-to-hidden matmul for all three gates (MXU)
        hg = jnp.dot(h, whh, preferred_element_type=jnp.float32) + bhh
        ig = ig_ref[t]          # (Bp, 3*Hp): precomputed x@W_ih + b_ih
        r = jax.nn.sigmoid(ig[:, :Hp] + hg[:, :Hp])
        z = jax.nn.sigmoid(ig[:, Hp:2 * Hp] + hg[:, Hp:2 * Hp])
        n = jnp.tanh(ig[:, 2 * Hp:] + r * hg[:, 2 * Hp:])
        h_new = (1.0 - z) * n + z * h
        out_ref[t] = h_new.astype(out_ref.dtype)
        return h_new

    h0 = jnp.zeros((Bp, Hp), jnp.float32)          # hidden=None -> zero init
    h_fin = lax.fori_loop(0, S, step, h0, unroll=bool(S <= 16))
    hfin_ref[...] = h_fin.astype(hfin_ref.dtype)


def encoder_forward(token_ids, embedding, w_ih, w_hh, b_ih, b_hh):
    """token_ids: (S, B) int32 (time-major, like PyTorch GRU default).
    embedding: (V, E); w_ih: (3, E, H); w_hh: (3, H, H); b_ih/b_hh: (3, H).
    Gate order (r, z, n).  Returns (encoder_outputs (S,B,H), encoder_hidden (1,B,H))."""
    S, B = token_ids.shape
    V, E = embedding.shape
    H = w_hh.shape[-1]

    Bp = max(8, _round_up(B, 8))      # sublane-dense batch
    Hp = max(128, _round_up(H, 128))  # lane-dense hidden

    f32 = jnp.float32
    emb = embedding.astype(f32)

    # ---- JAX glue: per-token input-gate table (V,3,H), then gather ----------
    table = jnp.einsum("ve,geh->vgh", emb, w_ih.astype(f32)) + b_ih.astype(f32)[None]
    table = jnp.pad(table, ((0, 0), (0, 0), (0, Hp - H)))            # (V, 3, Hp)
    i_gates = jnp.take(table, token_ids, axis=0)                     # (S, B, 3, Hp)
    i_gates = jnp.pad(i_gates, ((0, 0), (0, Bp - B), (0, 0), (0, 0)))
    i_gates = i_gates.reshape(S, Bp, 3 * Hp)

    # ---- fused, padded hidden-to-hidden weights ------------------------------
    whh_p = jnp.pad(w_hh.astype(f32), ((0, 0), (0, Hp - H), (0, Hp - H)))  # (3,Hp,Hp)
    whh_cat = jnp.concatenate([whh_p[0], whh_p[1], whh_p[2]], axis=1)      # (Hp, 3*Hp)
    bhh_cat = jnp.pad(b_hh.astype(f32), ((0, 0), (0, Hp - H))).reshape(1, 3 * Hp)

    out_p, hfin_p = pl.pallas_call(
        gru_kernel,
        out_shape=(
            jax.ShapeDtypeStruct((S, Bp, Hp), f32),
            jax.ShapeDtypeStruct((Bp, Hp), f32),
        ),
        grid_spec=pltpu.PrefetchScalarGridSpec(
            num_scalar_prefetch=0,
            grid=(1,),                       # whole recurrence in one grid step
            in_specs=[
                pl.BlockSpec((S, Bp, 3 * Hp), lambda i: (0, 0, 0)),  # i_gates slab
                pl.BlockSpec((Hp, 3 * Hp), lambda i: (0, 0)),        # fused W_hh
                pl.BlockSpec((1, 3 * Hp), lambda i: (0, 0)),         # fused b_hh
            ],
            out_specs=[
                pl.BlockSpec((S, Bp, Hp), lambda i: (0, 0, 0)),      # outputs
                pl.BlockSpec((Bp, Hp), lambda i: (0, 0)),            # final hidden
            ],
        ),
        compiler_params=pltpu.CompilerParams(
            dimension_semantics=("arbitrary",),
        ),
    )(i_gates, whh_cat, bhh_cat)

    # TODO(synk): for real sizes (large B) add a "parallel" batch-block grid axis
    # to use both v7x TensorCores; at B=4 the whole problem fits one core.
    encoder_outputs = out_p[:, :B, :H]
    encoder_hidden = hfin_p[:B, :H][None]
    return encoder_outputs, encoder_hidden


def encoder_reference(token_ids, embedding, w_ih, w_hh, b_ih, b_hh):
    """Pure-JAX reference (lax.scan) matching PyTorch GRU semantics."""
    x = jnp.take(embedding.astype(jnp.float32), token_ids, axis=0)   # (S, B, E)
    B = x.shape[1]
    H = w_hh.shape[-1]

    def step(h, xt):
        i_r = xt @ w_ih[0] + b_ih[0]
        i_z = xt @ w_ih[1] + b_ih[1]
        i_n = xt @ w_ih[2] + b_ih[2]
        h_r = h @ w_hh[0] + b_hh[0]
        h_z = h @ w_hh[1] + b_hh[1]
        h_n = h @ w_hh[2] + b_hh[2]
        r = jax.nn.sigmoid(i_r + h_r)
        z = jax.nn.sigmoid(i_z + h_z)
        n = jnp.tanh(i_n + r * h_n)
        h_new = (1.0 - z) * n + z * h
        return h_new, h_new

    h0 = jnp.zeros((B, H), jnp.float32)
    h_fin, outs = lax.scan(step, h0, x)
    return outs, h_fin[None]


if __name__ == "__main__":
    # Small shapes consistent with the module
    vocab_size = 50
    embedded_size = 16
    hidden_size = 32
    seq_len = 8
    batch = 4

    key = jax.random.PRNGKey(0)
    k_tok, k_emb, k_wih, k_whh, k_bih, k_bhh = jax.random.split(key, 6)

    bound = 1.0 / (hidden_size ** 0.5)
    embedding = jax.random.normal(k_emb, (vocab_size, embedded_size), jnp.float32)
    # Stored pre-transposed per gate: (3, in_dim, hidden) with gate order (r, z, n)
    w_ih = jax.random.uniform(k_wih, (3, embedded_size, hidden_size),
                              jnp.float32, -bound, bound)
    w_hh = jax.random.uniform(k_whh, (3, hidden_size, hidden_size),
                              jnp.float32, -bound, bound)
    b_ih = jax.random.uniform(k_bih, (3, hidden_size), jnp.float32, -bound, bound)
    b_hh = jax.random.uniform(k_bhh, (3, hidden_size), jnp.float32, -bound, bound)

    token_ids = jax.random.randint(k_tok, (seq_len, batch), 0, vocab_size, jnp.int32)

    outputs, hidden = encoder_forward(token_ids, embedding, w_ih, w_hh, b_ih, b_hh)
    outputs = jax.block_until_ready(outputs)
    hidden = jax.block_until_ready(hidden)

    ref_out, ref_hid = encoder_reference(token_ids, embedding, w_ih, w_hh, b_ih, b_hh)

    assert outputs.shape == (seq_len, batch, hidden_size)
    assert hidden.shape == (1, batch, hidden_size)
    assert jnp.allclose(outputs, ref_out, atol=1e-5, rtol=1e-5)
    assert jnp.allclose(hidden, ref_hid, atol=1e-5, rtol=1e-5)

    print("KERNEL_OK")
</pallas_src>

<mosaic_0001>
module attributes {stable_mosaic.version = 11 : i64} {
  func.func @gru_kernel(%arg0: i32, %arg1: memref<8x8x384xf32, #tpu.memory_space<vmem>>, %arg2: memref<128x384xf32, #tpu.memory_space<vmem>>, %arg3: memref<1x384xf32, #tpu.memory_space<vmem>>, %arg4: memref<8x8x128xf32, #tpu.memory_space<vmem>>, %arg5: memref<8x128xf32, #tpu.memory_space<vmem>>) attributes {dimension_semantics = [#tpu.dimension_semantics<arbitrary>], iteration_bounds = array<i64: 1>, scalar_prefetch = 0 : i64, scratch_operands = 0 : i64, tpu.core_type = #tpu.core_type<tc>, window_params = [{pipeline_mode = #tpu.pipeline_mode<synchronous>, transform_indices = @transform_0, window_bounds = array<i64: 8, 8, 384>}, {pipeline_mode = #tpu.pipeline_mode<synchronous>, transform_indices = @transform_1, window_bounds = array<i64: 128, 384>}, {pipeline_mode = #tpu.pipeline_mode<synchronous>, transform_indices = @transform_2, window_bounds = array<i64: 1, 384>}, {pipeline_mode = #tpu.pipeline_mode<synchronous>, transform_indices = @transform_3, window_bounds = array<i64: 8, 8, 128>}, {pipeline_mode = #tpu.pipeline_mode<synchronous>, transform_indices = @transform_4, window_bounds = array<i64: 8, 128>}]} {
    %c0 = arith.constant 0 : index
    %c0_0 = arith.constant 0 : index
    %0 = vector.load %arg2[%c0, %c0_0] : memref<128x384xf32, #tpu.memory_space<vmem>>, vector<128x384xf32>
    %c0_1 = arith.constant 0 : index
    %c0_2 = arith.constant 0 : index
    %1 = vector.load %arg3[%c0_1, %c0_2] : memref<1x384xf32, #tpu.memory_space<vmem>>, vector<1x384xf32>
    %cst = arith.constant 0.000000e+00 : f32
    %2 = vector.broadcast %cst : f32 to vector<8x128xf32>
    %c0_i32 = arith.constant 0 : i32
    %cst_3 = arith.constant dense<0.000000e+00> : vector<8x384xf32>
    %3 = tpu.matmul %2, %0, %cst_3 {dimension_numbers = #tpu.dot_dimension_numbers<[1], [0], [0], [1], [0, 0, 1, 1], [], []>} : vector<8x128xf32>, vector<128x384xf32>, vector<8x384xf32> -> vector<8x384xf32>
    %4 = vector.broadcast %1 : vector<1x384xf32> to vector<8x384xf32>
    %5 = arith.addf %3, %4 : vector<8x384xf32>
    %6 = arith.index_cast %c0_i32 : i32 to index
    %c0_4 = arith.constant 0 : index
    %c0_5 = arith.constant 0 : index
    %7 = vector.load %arg1[%6, %c0_4, %c0_5] : memref<8x8x384xf32, #tpu.memory_space<vmem>>, vector<1x8x384xf32>
    %8 = vector.shape_cast %7 : vector<1x8x384xf32> to vector<8x384xf32>
    %9 = vector.extract_strided_slice %8 {offsets = [0, 0], sizes = [8, 128], strides = [1, 1]} : vector<8x384xf32> to vector<8x128xf32>
    %10 = vector.extract_strided_slice %5 {offsets = [0, 0], sizes = [8, 128], strides = [1, 1]} : vector<8x384xf32> to vector<8x128xf32>
    %11 = arith.addf %9, %10 : vector<8x128xf32>
    %12 = arith.negf %11 : vector<8x128xf32>
    %13 = math.exp %12 : vector<8x128xf32>
    %cst_6 = arith.constant 1.000000e+00 : f32
    %14 = vector.broadcast %cst_6 : f32 to vector<8x128xf32>
    %15 = arith.addf %14, %13 : vector<8x128xf32>
    %16 = arith.divf %14, %15 : vector<8x128xf32>
    %17 = vector.extract_strided_slice %8 {offsets = [0, 128], sizes = [8, 128], strides = [1, 1]} : vector<8x384xf32> to vector<8x128xf32>
    %18 = vector.extract_strided_slice %5 {offsets = [0, 128], sizes = [8, 128], strides = [1, 1]} : vector<8x384xf32> to vector<8x128xf32>
    %19 = arith.addf %17, %18 : vector<8x128xf32>
    %20 = arith.negf %19 : vector<8x128xf32>
    %21 = math.exp %20 : vector<8x128xf32>
    %cst_7 = arith.constant 1.000000e+00 : f32
    %22 = vector.broadcast %cst_7 : f32 to vector<8x128xf32>
    %23 = arith.addf %22, %21 : vector<8x128xf32>
    %24 = arith.divf %22, %23 : vector<8x128xf32>
    %25 = vector.extract_strided_slice %8 {offsets = [0, 256], sizes = [8, 128], strides = [1, 1]} : vector<8x384xf32> to vector<8x128xf32>
    %26 = vector.extract_strided_slice %5 {offsets = [0, 256], sizes = [8, 128], strides = [1, 1]} : vector<8x384xf32> to vector<8x128xf32>
    %27 = arith.mulf %16, %26 : vector<8x128xf32>
    %28 = arith.addf %25, %27 : vector<8x128xf32>
    %29 = math.tanh %28 : vector<8x128xf32>
    %cst_8 = arith.constant 1.000000e+00 : f32
    %30 = vector.broadcast %cst_8 : f32 to vector<8x128xf32>
    %31 = arith.subf %30, %24 : vector<8x128xf32>
    %32 = arith.mulf %31, %29 : vector<8x128xf32>
    %33 = arith.mulf %24, %2 : vector<8x128xf32>
    %34 = arith.addf %32, %33 : vector<8x128xf32>
    %35 = arith.index_cast %c0_i32 : i32 to index
    %c0_9 = arith.constant 0 : index
    %c0_10 = arith.constant 0 : index
    %36 = vector.load %arg4[%35, %c0_9, %c0_10] : memref<8x8x128xf32, #tpu.memory_space<vmem>>, vector<1x8x128xf32>
    %37 = vector.shape_cast %36 : vector<1x8x128xf32> to vector<8x128xf32>
    %38 = vector.shape_cast %34 : vector<8x128xf32> to vector<1x8x128xf32>
    tpu.vector_store %arg4[%35, %c0_9, %c0_10], %38 {strides = array<i32>} : memref<8x8x128xf32, #tpu.memory_space<vmem>>, vector<1x8x128xf32>,
    %c1_i32 = arith.constant 1 : i32
    %cst_11 = arith.constant dense<0.000000e+00> : vector<8x384xf32>
    %39 = tpu.matmul %34, %0, %cst_11 {dimension_numbers = #tpu.dot_dimension_numbers<[1], [0], [0], [1], [0, 0, 1, 1], [], []>} : vector<8x128xf32>, vector<128x384xf32>, vector<8x384xf32> -> vector<8x384xf32>
    %40 = vector.broadcast %1 : vector<1x384xf32> to vector<8x384xf32>
    %41 = arith.addf %39, %40 : vector<8x384xf32>
    %42 = arith.index_cast %c1_i32 : i32 to index
    %c0_12 = arith.constant 0 : index
    %c0_13 = arith.constant 0 : index
    %43 = vector.load %arg1[%42, %c0_12, %c0_13] : memref<8x8x384xf32, #tpu.memory_space<vmem>>, vector<1x8x384xf32>
    %44 = vector.shape_cast %43 : vector<1x8x384xf32> to vector<8x384xf32>
    %45 = vector.extract_strided_slice %44 {offsets = [0, 0], sizes = [8, 128], strides = [1, 1]} : vector<8x384xf32> to vector<8x128xf32>
    %46 = vector.extract_strided_slice %41 {offsets = [0, 0], sizes = [8, 128], strides = [1, 1]} : vector<8x384xf32> to vector<8x128xf32>
    %47 = arith.addf %45, %46 : vector<8x128xf32>
    %48 = arith.negf %47 : vector<8x128xf32>
    %49 = math.exp %48 : vector<8x128xf32>
    %cst_14 = arith.constant 1.000000e+00 : f32
    %50 = vector.broadcast %cst_14 : f32 to vector<8x128xf32>
    %51 = arith.addf %50, %49 : vector<8x128xf32>
    %52 = arith.divf %50, %51 : vector<8x128xf32>
    %53 = vector.extract_strided_slice %44 {offsets = [0, 128], sizes = [8, 128], strides = [1, 1]} : vector<8x384xf32> to vector<8x128xf32>
    %54 = vector.extract_strided_slice %41 {offsets = [0, 128], sizes = [8, 128], strides = [1, 1]} : vector<8x384xf32> to vector<8x128xf32>
    %55 = arith.addf %53, %54 : vector<8x128xf32>
    %56 = arith.negf %55 : vector<8x128xf32>
    %57 = math.exp %56 : vector<8x128xf32>
    %cst_15 = arith.constant 1.000000e+00 : f32
    %58 = vector.broadcast %cst_15 : f32 to vector<8x128xf32>
    %59 = arith.addf %58, %57 : vector<8x128xf32>
    %60 = arith.divf %58, %59 : vector<8x128xf32>
    %61 = vector.extract_strided_slice %44 {offsets = [0, 256], sizes = [8, 128], strides = [1, 1]} : vector<8x384xf32> to vector<8x128xf32>
    %62 = vector.extract_strided_slice %41 {offsets = [0, 256], sizes = [8, 128], strides = [1, 1]} : vector<8x384xf32> to vector<8x128xf32>
    %63 = arith.mulf %52, %62 : vector<8x128xf32>
    %64 = arith.addf %61, %63 : vector<8x128xf32>
    %65 = math.tanh %64 : vector<8x128xf32>
    %cst_16 = arith.constant 1.000000e+00 : f32
    %66 = vector.broadcast %cst_16 : f32 to vector<8x128xf32>
    %67 = arith.subf %66, %60 : vector<8x128xf32>
    %68 = arith.mulf %67, %65 : vector<8x128xf32>
    %69 = arith.mulf %60, %34 : vector<8x128xf32>
    %70 = arith.addf %68, %69 : vector<8x128xf32>
    %71 = arith.index_cast %c1_i32 : i32 to index
    %c0_17 = arith.constant 0 : index
    %c0_18 = arith.constant 0 : index
    %72 = vector.load %arg4[%71, %c0_17, %c0_18] : memref<8x8x128xf32, #tpu.memory_space<vmem>>, vector<1x8x128xf32>
    %73 = vector.shape_cast %72 : vector<1x8x128xf32> to vector<8x128xf32>
    %74 = vector.shape_cast %70 : vector<8x128xf32> to vector<1x8x128xf32>
    tpu.vector_store %arg4[%71, %c0_17, %c0_18], %74 {strides = array<i32>} : memref<8x8x128xf32, #tpu.memory_space<vmem>>, vector<1x8x128xf32>,
    %c2_i32 = arith.constant 2 : i32
    %cst_19 = arith.constant dense<0.000000e+00> : vector<8x384xf32>
    %75 = tpu.matmul %70, %0, %cst_19 {dimension_numbers = #tpu.dot_dimension_numbers<[1], [0], [0], [1], [0, 0, 1, 1], [], []>} : vector<8x128xf32>, vector<128x384xf32>, vector<8x384xf32> -> vector<8x384xf32>
    %76 = vector.broadcast %1 : vector<1x384xf32> to vector<8x384xf32>
    %77 = arith.addf %75, %76 : vector<8x384xf32>
    %78 = arith.index_cast %c2_i32 : i32 to index
    %c0_20 = arith.constant 0 : index
    %c0_21 = arith.constant 0 : index
    %79 = vector.load %arg1[%78, %c0_20, %c0_21] : memref<8x8x384xf32, #tpu.memory_space<vmem>>, vector<1x8x384xf32>
    %80 = vector.shape_cast %79 : vector<1x8x384xf32> to vector<8x384xf32>
    %81 = vector.extract_strided_slice %80 {offsets = [0, 0], sizes = [8, 128], strides = [1, 1]} : vector<8x384xf32> to vector<8x128xf32>
    %82 = vector.extract_strided_slice %77 {offsets = [0, 0], sizes = [8, 128], strides = [1, 1]} : vector<8x384xf32> to vector<8x128xf32>
    %83 = arith.addf %81, %82 : vector<8x128xf32>
    %84 = arith.negf %83 : vector<8x128xf32>
    %85 = math.exp %84 : vector<8x128xf32>
    %cst_22 = arith.constant 1.000000e+00 : f32
    %86 = vector.broadcast %cst_22 : f32 to vector<8x128xf32>
    %87 = arith.addf %86, %85 : vector<8x128xf32>
    %88 = arith.divf %86, %87 : vector<8x128xf32>
    %89 = vector.extract_strided_slice %80 {offsets = [0, 128], sizes = [8, 128], strides = [1, 1]} : vector<8x384xf32> to vector<8x128xf32>
    %90 = vector.extract_strided_slice %77 {offsets = [0, 128], sizes = [8, 128], strides = [1, 1]} : vector<8x384xf32> to vector<8x128xf32>
    %91 = arith.addf %89, %90 : vector<8x128xf32>
    %92 = arith.negf %91 : vector<8x128xf32>
    %93 = math.exp %92 : vector<8x128xf32>
    %cst_23 = arith.constant 1.000000e+00 : f32
    %94 = vector.broadcast %cst_23 : f32 to vector<8x128xf32>
    %95 = arith.addf %94, %93 : vector<8x128xf32>
    %96 = arith.divf %94, %95 : vector<8x128xf32>
    %97 = vector.extract_strided_slice %80 {offsets = [0, 256], sizes = [8, 128], strides = [1, 1]} : vector<8x384xf32> to vector<8x128xf32>
    %98 = vector.extract_strided_slice %77 {offsets = [0, 256], sizes = [8, 128], strides = [1, 1]} : vector<8x384xf32> to vector<8x128xf32>
    %99 = arith.mulf %88, %98 : vector<8x128xf32>
    %100 = arith.addf %97, %99 : vector<8x128xf32>
    %101 = math.tanh %100 : vector<8x128xf32>
    %cst_24 = arith.constant 1.000000e+00 : f32
    %102 = vector.broadcast %cst_24 : f32 to vector<8x128xf32>
    %103 = arith.subf %102, %96 : vector<8x128xf32>
    %104 = arith.mulf %103, %101 : vector<8x128xf32>
    %105 = arith.mulf %96, %70 : vector<8x128xf32>
    %106 = arith.addf %104, %105 : vector<8x128xf32>
    %107 = arith.index_cast %c2_i32 : i32 to index
    %c0_25 = arith.constant 0 : index
    %c0_26 = arith.constant 0 : index
    %108 = vector.load %arg4[%107, %c0_25, %c0_26] : memref<8x8x128xf32, #tpu.memory_space<vmem>>, vector<1x8x128xf32>
    %109 = vector.shape_cast %108 : vector<1x8x128xf32> to vector<8x128xf32>
    %110 = vector.shape_cast %106 : vector<8x128xf32> to vector<1x8x128xf32>
    tpu.vector_store %arg4[%107, %c0_25, %c0_26], %110 {strides = array<i32>} : memref<8x8x128xf32, #tpu.memory_space<vmem>>, vector<1x8x128xf32>,
    %c3_i32 = arith.constant 3 : i32
    %cst_27 = arith.constant dense<0.000000e+00> : vector<8x384xf32>
    %111 = tpu.matmul %106, %0, %cst_27 {dimension_numbers = #tpu.dot_dimension_numbers<[1], [0], [0], [1], [0, 0, 1, 1], [], []>} : vector<8x128xf32>, vector<128x384xf32>, vector<8x384xf32> -> vector<8x384xf32>
    %112 = vector.broadcast %1 : vector<1x384xf32> to vector<8x384xf32>
    %113 = arith.addf %111, %112 : vector<8x384xf32>
    %114 = arith.index_cast %c3_i32 : i32 to index
    %c0_28 = arith.constant 0 : index
    %c0_29 = arith.constant 0 : index
    %115 = vector.load %arg1[%114, %c0_28, %c0_29] : memref<8x8x384xf32, #tpu.memory_space<vmem>>, vector<1x8x384xf32>
    %116 = vector.shape_cast %115 : vector<1x8x384xf32> to vector<8x384xf32>
    %117 = vector.extract_strided_slice %116 {offsets = [0, 0], sizes = [8, 128], strides = [1, 1]} : vector<8x384xf32> to vector<8x128xf32>
    %118 = vector.extract_strided_slice %113 {offsets = [0, 0], sizes = [8, 128], strides = [1, 1]} : vector<8x384xf32> to vector<8x128xf32>
    %119 = arith.addf %117, %118 : vector<8x128xf32>
    %120 = arith.negf %119 : vector<8x128xf32>
    %121 = math.exp %120 : vector<8x128xf32>
    %cst_30 = arith.constant 1.000000e+00 : f32
    %122 = vector.broadcast %cst_30 : f32 to vector<8x128xf32>
    %123 = arith.addf %122, %121 : vector<8x128xf32>
    %124 = arith.divf %122, %123 : vector<8x128xf32>
    %125 = vector.extract_strided_slice %116 {offsets = [0, 128], sizes = [8, 128], strides = [1, 1]} : vector<8x384xf32> to vector<8x128xf32>
    %126 = vector.extract_strided_slice %113 {offsets = [0, 128], sizes = [8, 128], strides = [1, 1]} : vector<8x384xf32> to vector<8x128xf32>
    %127 = arith.addf %125, %126 : vector<8x128xf32>
    %128 = arith.negf %127 : vector<8x128xf32>
    %129 = math.exp %128 : vector<8x128xf32>
    %cst_31 = arith.constant 1.000000e+00 : f32
    %130 = vector.broadcast %cst_31 : f32 to vector<8x128xf32>
    %131 = arith.addf %130, %129 : vector<8x128xf32>
    %132 = arith.divf %130, %131 : vector<8x128xf32>
    %133 = vector.extract_strided_slice %116 {offsets = [0, 256], sizes = [8, 128], strides = [1, 1]} : vector<8x384xf32> to vector<8x128xf32>
    %134 = vector.extract_strided_slice %113 {offsets = [0, 256], sizes = [8, 128], strides = [1, 1]} : vector<8x384xf32> to vector<8x128xf32>
    %135 = arith.mulf %124, %134 : vector<8x128xf32>
    %136 = arith.addf %133, %135 : vector<8x128xf32>
    %137 = math.tanh %136 : vector<8x128xf32>
    %cst_32 = arith.constant 1.000000e+00 : f32
    %138 = vector.broadcast %cst_32 : f32 to vector<8x128xf32>
    %139 = arith.subf %138, %132 : vector<8x128xf32>
    %140 = arith.mulf %139, %137 : vector<8x128xf32>
    %141 = arith.mulf %132, %106 : vector<8x128xf32>
    %142 = arith.addf %140, %141 : vector<8x128xf32>
    %143 = arith.index_cast %c3_i32 : i32 to index
    %c0_33 = arith.constant 0 : index
    %c0_34 = arith.constant 0 : index
    %144 = vector.load %arg4[%143, %c0_33, %c0_34] : memref<8x8x128xf32, #tpu.memory_space<vmem>>, vector<1x8x128xf32>
    %145 = vector.shape_cast %144 : vector<1x8x128xf32> to vector<8x128xf32>
    %146 = vector.shape_cast %142 : vector<8x128xf32> to vector<1x8x128xf32>
    tpu.vector_store %arg4[%143, %c0_33, %c0_34], %146 {strides = array<i32>} : memref<8x8x128xf32, #tpu.memory_space<vmem>>, vector<1x8x128xf32>,
    %c4_i32 = arith.constant 4 : i32
    %cst_35 = arith.constant dense<0.000000e+00> : vector<8x384xf32>
    %147 = tpu.matmul %142, %0, %cst_35 {dimension_numbers = #tpu.dot_dimension_numbers<[1], [0], [0], [1], [0, 0, 1, 1], [], []>} : vector<8x128xf32>, vector<128x384xf32>, vector<8x384xf32> -> vector<8x384xf32>
    %148 = vector.broadcast %1 : vector<1x384xf32> to vector<8x384xf32>
    %149 = arith.addf %147, %148 : vector<8x384xf32>
    %150 = arith.index_cast %c4_i32 : i32 to index
    %c0_36 = arith.constant 0 : index
    %c0_37 = arith.constant 0 : index
    %151 = vector.load %arg1[%150, %c0_36, %c0_37] : memref<8x8x384xf32, #tpu.memory_space<vmem>>, vector<1x8x384xf32>
    %152 = vector.shape_cast %151 : vector<1x8x384xf32> to vector<8x384xf32>
    %153 = vector.extract_strided_slice %152 {offsets = [0, 0], sizes = [8, 128], strides = [1, 1]} : vector<8x384xf32> to vector<8x128xf32>
    %154 = vector.extract_strided_slice %149 {offsets = [0, 0], sizes = [8, 128], strides = [1, 1]} : vector<8x384xf32> to vector<8x128xf32>
    %155 = arith.addf %153, %154 : vector<8x128xf32>
    %156 = arith.negf %155 : vector<8x128xf32>
    %157 = math.exp %156 : vector<8x128xf32>
    %cst_38 = arith.constant 1.000000e+00 : f32
    %158 = vector.broadcast %cst_38 : f32 to vector<8x128xf32>
    %159 = arith.addf %158, %157 : vector<8x128xf32>
    %160 = arith.divf %158, %159 : vector<8x128xf32>
    %161 = vector.extract_strided_slice %152 {offsets = [0, 128], sizes = [8, 128], strides = [1, 1]} : vector<8x384xf32> to vector<8x128xf32>
    %162 = vector.extract_strided_slice %149 {offsets = [0, 128], sizes = [8, 128], strides = [1, 1]} : vector<8x384xf32> to vector<8x128xf32>
    %163 = arith.addf %161, %162 : vector<8x128xf32>
    %164 = arith.negf %163 : vector<8x128xf32>
    %165 = math.exp %164 : vector<8x128xf32>
    %cst_39 = arith.constant 1.000000e+00 : f32
    %166 = vector.broadcast %cst_39 : f32 to vector<8x128xf32>
    %167 = arith.addf %166, %165 : vector<8x128xf32>
    %168 = arith.divf %166, %167 : vector<8x128xf32>
    %169 = vector.extract_strided_slice %152 {offsets = [0, 256], sizes = [8, 128], strides = [1, 1]} : vector<8x384xf32> to vector<8x128xf32>
    %170 = vector.extract_strided_slice %149 {offsets = [0, 256], sizes = [8, 128], strides = [1, 1]} : vector<8x384xf32> to vector<8x128xf32>
    %171 = arith.mulf %160, %170 : vector<8x128xf32>
    %172 = arith.addf %169, %171 : vector<8x128xf32>
    %173 = math.tanh %172 : vector<8x128xf32>
    %cst_40 = arith.constant 1.000000e+00 : f32
    %174 = vector.broadcast %cst_40 : f32 to vector<8x128xf32>
    %175 = arith.subf %174, %168 : vector<8x128xf32>
    %176 = arith.mulf %175, %173 : vector<8x128xf32>
    %177 = arith.mulf %168, %142 : vector<8x128xf32>
    %178 = arith.addf %176, %177 : vector<8x128xf32>
    %179 = arith.index_cast %c4_i32 : i32 to index
    %c0_41 = arith.constant 0 : index
    %c0_42 = arith.constant 0 : index
    %180 = vector.load %arg4[%179, %c0_41, %c0_42] : memref<8x8x128xf32, #tpu.memory_space<vmem>>, vector<1x8x128xf32>
    %181 = vector.shape_cast %180 : vector<1x8x128xf32> to vector<8x128xf32>
    %182 = vector.shape_cast %178 : vector<8x128xf32> to vector<1x8x128xf32>
    tpu.vector_store %arg4[%179, %c0_41, %c0_42], %182 {strides = array<i32>} : memref<8x8x128xf32, #tpu.memory_space<vmem>>, vector<1x8x128xf32>,
    %c5_i32 = arith.constant 5 : i32
    %cst_43 = arith.constant dense<0.000000e+00> : vector<8x384xf32>
    %183 = tpu.matmul %178, %0, %cst_43 {dimension_numbers = #tpu.dot_dimension_numbers<[1], [0], [0], [1], [0, 0, 1, 1], [], []>} : vector<8x128xf32>, vector<128x384xf32>, vector<8x384xf32> -> vector<8x384xf32>
    %184 = vector.broadcast %1 : vector<1x384xf32> to vector<8x384xf32>
    %185 = arith.addf %183, %184 : vector<8x384xf32>
    %186 = arith.index_cast %c5_i32 : i32 to index
    %c0_44 = arith.constant 0 : index
    %c0_45 = arith.constant 0 : index
    %187 = vector.load %arg1[%186, %c0_44, %c0_45] : memref<8x8x384xf32, #tpu.memory_space<vmem>>, vector<1x8x384xf32>
    %188 = vector.shape_cast %187 : vector<1x8x384xf32> to vector<8x384xf32>
    %189 = vector.extract_strided_slice %188 {offsets = [0, 0], sizes = [8, 128], strides = [1, 1]} : vector<8x384xf32> to vector<8x128xf32>
    %190 = vector.extract_strided_slice %185 {offsets = [0, 0], sizes = [8, 128], strides = [1, 1]} : vector<8x384xf32> to vector<8x128xf32>
    %191 = arith.addf %189, %190 : vector<8x128xf32>
    %192 = arith.negf %191 : vector<8x128xf32>
    %193 = math.exp %192 : vector<8x128xf32>
    %cst_46 = arith.constant 1.000000e+00 : f32
    %194 = vector.broadcast %cst_46 : f32 to vector<8x128xf32>
    %195 = arith.addf %194, %193 : vector<8x128xf32>
    %196 = arith.divf %194, %195 : vector<8x128xf32>
    %197 = vector.extract_strided_slice %188 {offsets = [0, 128], sizes = [8, 128], strides = [1, 1]} : vector<8x384xf32> to vector<8x128xf32>
    %198 = vector.extract_strided_slice %185 {offsets = [0, 128], sizes = [8, 128], strides = [1, 1]} : vector<8x384xf32> to vector<8x128xf32>
    %199 = arith.addf %197, %198 : vector<8x128xf32>
    %200 = arith.negf %199 : vector<8x128xf32>
    %201 = math.exp %200 : vector<8x128xf32>
    %cst_47 = arith.constant 1.000000e+00 : f32
    %202 = vector.broadcast %cst_47 : f32 to vector<8x128xf32>
    %203 = arith.addf %202, %201 : vector<8x128xf32>
    %204 = arith.divf %202, %203 : vector<8x128xf32>
    %205 = vector.extract_strided_slice %188 {offsets = [0, 256], sizes = [8, 128], strides = [1, 1]} : vector<8x384xf32> to vector<8x128xf32>
    %206 = vector.extract_strided_slice %185 {offsets = [0, 256], sizes = [8, 128], strides = [1, 1]} : vector<8x384xf32> to vector<8x128xf32>
    %207 = arith.mulf %196, %206 : vector<8x128xf32>
    %208 = arith.addf %205, %207 : vector<8x128xf32>
    %209 = math.tanh %208 : vector<8x128xf32>
    %cst_48 = arith.constant 1.000000e+00 : f32
    %210 = vector.broadcast %cst_48 : f32 to vector<8x128xf32>
    %211 = arith.subf %210, %204 : vector<8x128xf32>
    %212 = arith.mulf %211, %209 : vector<8x128xf32>
    %213 = arith.mulf %204, %178 : vector<8x128xf32>
    %214 = arith.addf %212, %213 : vector<8x128xf32>
    %215 = arith.index_cast %c5_i32 : i32 to index
    %c0_49 = arith.constant 0 : index
    %c0_50 = arith.constant 0 : index
    %216 = vector.load %arg4[%215, %c0_49, %c0_50] : memref<8x8x128xf32, #tpu.memory_space<vmem>>, vector<1x8x128xf32>
    %217 = vector.shape_cast %216 : vector<1x8x128xf32> to vector<8x128xf32>
    %218 = vector.shape_cast %214 : vector<8x128xf32> to vector<1x8x128xf32>
    tpu.vector_store %arg4[%215, %c0_49, %c0_50], %218 {strides = array<i32>} : memref<8x8x128xf32, #tpu.memory_space<vmem>>, vector<1x8x128xf32>,
    %c6_i32 = arith.constant 6 : i32
    %cst_51 = arith.constant dense<0.000000e+00> : vector<8x384xf32>
    %219 = tpu.matmul %214, %0, %cst_51 {dimension_numbers = #tpu.dot_dimension_numbers<[1], [0], [0], [1], [0, 0, 1, 1], [], []>} : vector<8x128xf32>, vector<128x384xf32>, vector<8x384xf32> -> vector<8x384xf32>
    %220 = vector.broadcast %1 : vector<1x384xf32> to vector<8x384xf32>
    %221 = arith.addf %219, %220 : vector<8x384xf32>
    %222 = arith.index_cast %c6_i32 : i32 to index
    %c0_52 = arith.constant 0 : index
    %c0_53 = arith.constant 0 : index
    %223 = vector.load %arg1[%222, %c0_52, %c0_53] : memref<8x8x384xf32, #tpu.memory_space<vmem>>, vector<1x8x384xf32>
    %224 = vector.shape_cast %223 : vector<1x8x384xf32> to vector<8x384xf32>
    %225 = vector.extract_strided_slice %224 {offsets = [0, 0], sizes = [8, 128], strides = [1, 1]} : vector<8x384xf32> to vector<8x128xf32>
    %226 = vector.extract_strided_slice %221 {offsets = [0, 0], sizes = [8, 128], strides = [1, 1]} : vector<8x384xf32> to vector<8x128xf32>
    %227 = arith.addf %225, %226 : vector<8x128xf32>
    %228 = arith.negf %227 : vector<8x128xf32>
    %229 = math.exp %228 : vector<8x128xf32>
    %cst_54 = arith.constant 1.000000e+00 : f32
    %230 = vector.broadcast %cst_54 : f32 to vector<8x128xf32>
    %231 = arith.addf %230, %229 : vector<8x128xf32>
    %232 = arith.divf %230, %231 : vector<8x128xf32>
    %233 = vector.extract_strided_slice %224 {offsets = [0, 128], sizes = [8, 128], strides = [1, 1]} : vector<8x384xf32> to vector<8x128xf32>
    %234 = vector.extract_strided_slice %221 {offsets = [0, 128], sizes = [8, 128], strides = [1, 1]} : vector<8x384xf32> to vector<8x128xf32>
    %235 = arith.addf %233, %234 : vector<8x128xf32>
    %236 = arith.negf %235 : vector<8x128xf32>
    %237 = math.exp %236 : vector<8x128xf32>
    %cst_55 = arith.constant 1.000000e+00 : f32
    %238 = vector.broadcast %cst_55 : f32 to vector<8x128xf32>
    %239 = arith.addf %238, %237 : vector<8x128xf32>
    %240 = arith.divf %238, %239 : vector<8x128xf32>
    %241 = vector.extract_strided_slice %224 {offsets = [0, 256], sizes = [8, 128], strides = [1, 1]} : vector<8x384xf32> to vector<8x128xf32>
    %242 = vector.extract_strided_slice %221 {offsets = [0, 256], sizes = [8, 128], strides = [1, 1]} : vector<8x384xf32> to vector<8x128xf32>
    %243 = arith.mulf %232, %242 : vector<8x128xf32>
    %244 = arith.addf %241, %243 : vector<8x128xf32>
    %245 = math.tanh %244 : vector<8x128xf32>
    %cst_56 = arith.constant 1.000000e+00 : f32
    %246 = vector.broadcast %cst_56 : f32 to vector<8x128xf32>
    %247 = arith.subf %246, %240 : vector<8x128xf32>
    %248 = arith.mulf %247, %245 : vector<8x128xf32>
    %249 = arith.mulf %240, %214 : vector<8x128xf32>
    %250 = arith.addf %248, %249 : vector<8x128xf32>
    %251 = arith.index_cast %c6_i32 : i32 to index
    %c0_57 = arith.constant 0 : index
    %c0_58 = arith.constant 0 : index
    %252 = vector.load %arg4[%251, %c0_57, %c0_58] : memref<8x8x128xf32, #tpu.memory_space<vmem>>, vector<1x8x128xf32>
    %253 = vector.shape_cast %252 : vector<1x8x128xf32> to vector<8x128xf32>
    %254 = vector.shape_cast %250 : vector<8x128xf32> to vector<1x8x128xf32>
    tpu.vector_store %arg4[%251, %c0_57, %c0_58], %254 {strides = array<i32>} : memref<8x8x128xf32, #tpu.memory_space<vmem>>, vector<1x8x128xf32>,
    %c7_i32 = arith.constant 7 : i32
    %cst_59 = arith.constant dense<0.000000e+00> : vector<8x384xf32>
    %255 = tpu.matmul %250, %0, %cst_59 {dimension_numbers = #tpu.dot_dimension_numbers<[1], [0], [0], [1], [0, 0, 1, 1], [], []>} : vector<8x128xf32>, vector<128x384xf32>, vector<8x384xf32> -> vector<8x384xf32>
    %256 = vector.broadcast %1 : vector<1x384xf32> to vector<8x384xf32>
    %257 = arith.addf %255, %256 : vector<8x384xf32>
    %258 = arith.index_cast %c7_i32 : i32 to index
    %c0_60 = arith.constant 0 : index
    %c0_61 = arith.constant 0 : index
    %259 = vector.load %arg1[%258, %c0_60, %c0_61] : memref<8x8x384xf32, #tpu.memory_space<vmem>>, vector<1x8x384xf32>
    %260 = vector.shape_cast %259 : vector<1x8x384xf32> to vector<8x384xf32>
    %261 = vector.extract_strided_slice %260 {offsets = [0, 0], sizes = [8, 128], strides = [1, 1]} : vector<8x384xf32> to vector<8x128xf32>
    %262 = vector.extract_strided_slice %257 {offsets = [0, 0], sizes = [8, 128], strides = [1, 1]} : vector<8x384xf32> to vector<8x128xf32>
    %263 = arith.addf %261, %262 : vector<8x128xf32>
    %264 = arith.negf %263 : vector<8x128xf32>
    %265 = math.exp %264 : vector<8x128xf32>
    %cst_62 = arith.constant 1.000000e+00 : f32
    %266 = vector.broadcast %cst_62 : f32 to vector<8x128xf32>
    %267 = arith.addf %266, %265 : vector<8x128xf32>
    %268 = arith.divf %266, %267 : vector<8x128xf32>
    %269 = vector.extract_strided_slice %260 {offsets = [0, 128], sizes = [8, 128], strides = [1, 1]} : vector<8x384xf32> to vector<8x128xf32>
    %270 = vector.extract_strided_slice %257 {offsets = [0, 128], sizes = [8, 128], strides = [1, 1]} : vector<8x384xf32> to vector<8x128xf32>
    %271 = arith.addf %269, %270 : vector<8x128xf32>
    %272 = arith.negf %271 : vector<8x128xf32>
    %273 = math.exp %272 : vector<8x128xf32>
    %cst_63 = arith.constant 1.000000e+00 : f32
    %274 = vector.broadcast %cst_63 : f32 to vector<8x128xf32>
    %275 = arith.addf %274, %273 : vector<8x128xf32>
    %276 = arith.divf %274, %275 : vector<8x128xf32>
    %277 = vector.extract_strided_slice %260 {offsets = [0, 256], sizes = [8, 128], strides = [1, 1]} : vector<8x384xf32> to vector<8x128xf32>
    %278 = vector.extract_strided_slice %257 {offsets = [0, 256], sizes = [8, 128], strides = [1, 1]} : vector<8x384xf32> to vector<8x128xf32>
    %279 = arith.mulf %268, %278 : vector<8x128xf32>
    %280 = arith.addf %277, %279 : vector<8x128xf32>
    %281 = math.tanh %280 : vector<8x128xf32>
    %cst_64 = arith.constant 1.000000e+00 : f32
    %282 = vector.broadcast %cst_64 : f32 to vector<8x128xf32>
    %283 = arith.subf %282, %276 : vector<8x128xf32>
    %284 = arith.mulf %283, %281 : vector<8x128xf32>
    %285 = arith.mulf %276, %250 : vector<8x128xf32>
    %286 = arith.addf %284, %285 : vector<8x128xf32>
    %287 = arith.index_cast %c7_i32 : i32 to index
    %c0_65 = arith.constant 0 : index
    %c0_66 = arith.constant 0 : index
    %288 = vector.load %arg4[%287, %c0_65, %c0_66] : memref<8x8x128xf32, #tpu.memory_space<vmem>>, vector<1x8x128xf32>
    %289 = vector.shape_cast %288 : vector<1x8x128xf32> to vector<8x128xf32>
    %290 = vector.shape_cast %286 : vector<8x128xf32> to vector<1x8x128xf32>
    tpu.vector_store %arg4[%287, %c0_65, %c0_66], %290 {strides = array<i32>} : memref<8x8x128xf32, #tpu.memory_space<vmem>>, vector<1x8x128xf32>,
    %c8_i32 = arith.constant 8 : i32
    %c0_67 = arith.constant 0 : index
    %c0_68 = arith.constant 0 : index
    %291 = vector.load %arg5[%c0_67, %c0_68] : memref<8x128xf32, #tpu.memory_space<vmem>>, vector<8x128xf32>
    tpu.vector_store %arg5[%c0_67, %c0_68], %286 {strides = array<i32>} : memref<8x128xf32, #tpu.memory_space<vmem>>, vector<8x128xf32>,
    return
  }
  func.func @transform_0(%arg0: i32) -> (i32, i32, i32) {
    %c0_i32 = arith.constant 0 : i32
    %c0_i32_0 = arith.constant 0 : i32
    %c0_i32_1 = arith.constant 0 : i32
    %c0_i32_2 = arith.constant 0 : i32
    return %c0_i32, %c0_i32_0, %c0_i32_1 : i32, i32, i32
  }
  func.func @transform_1(%arg0: i32) -> (i32, i32) {
    %c0_i32 = arith.constant 0 : i32
    %c0_i32_0 = arith.constant 0 : i32
    %c0_i32_1 = arith.constant 0 : i32
    return %c0_i32, %c0_i32_0 : i32, i32
  }
  func.func @transform_2(%arg0: i32) -> (i32, i32) {
    %c0_i32 = arith.constant 0 : i32
    %c0_i32_0 = arith.constant 0 : i32
    %c0_i32_1 = arith.constant 0 : i32
    return %c0_i32, %c0_i32_0 : i32, i32
  }
  func.func @transform_3(%arg0: i32) -> (i32, i32, i32) {
    %c0_i32 = arith.constant 0 : i32
    %c0_i32_0 = arith.constant 0 : i32
    %c0_i32_1 = arith.constant 0 : i32
    %c0_i32_2 = arith.constant 0 : i32
    return %c0_i32, %c0_i32_0, %c0_i32_1 : i32, i32, i32
  }
  func.func @transform_4(%arg0: i32) -> (i32, i32) {
    %c0_i32 = arith.constant 0 : i32
    %c0_i32_0 = arith.constant 0 : i32
    %c0_i32_1 = arith.constant 0 : i32
    return %c0_i32, %c0_i32_0 : i32, i32
  }
}

</mosaic_0001>

<llo_original>
// kernel: tpu_custom_call.1
$region0: #{tpu_custom_call.1}
  #allocation0 [shape = 'u32[]', space=smem, size = 0x4, offset = 0x4, fixed_abs, tag = 'smem constant byte address 0x4 - core index']
  #allocation1 [shape = 'u32[144,128]{1,0:T(1,128)}', space=vmem, size = 0x12000, scoped, tag = 'internal scratch']
  %s0 = inlined_call_operand.hbm [shape: f32[8,8,384], index: 0, kind: input, shape index: {}]
  %s1 = inlined_call_operand.hbm [shape: f32[128,384], index: 1, kind: input, shape index: {}]
  %s2 = inlined_call_operand.vmem [shape: f32[1,384], index: 2, kind: input, shape index: {}]
  %s3 = inlined_call_operand.hbm [shape: f32[8,8,128], index: 3, kind: output, shape index: {0}]
  %s4 = inlined_call_operand.hbm [shape: f32[8,128], index: 4, kind: output, shape index: {1}]
  %5 = xla_tuple %s3, %s4
  %s6 = sld [smem:[#allocation0]]
  $region38: #{tpu_custom_call.1} parent=0
    _
  %s8 = ssub.s32 1, %s6
  %s9 = scalar_select 0, %s8, %s6
  $region1: #{tpu_custom_call.1} parent=0
    #allocation2 [shape = 'u8[98304]{0}', space=vmem, size = 0x18000, scoped, tag = 'input window, operand 0, single buffered']
    #allocation3 [shape = 's32[1]{0}', space=sflag, size = 0x4, scoped, tag = 'scoped memory for tpu_custom_call.1']
    #allocation4 [shape = 's32[1]{0}', space=sflag, size = 0x4, scoped, tag = 'scoped memory for tpu_custom_call.1']
    #allocation5 [shape = 'u8[196608]{0}', space=vmem, size = 0x30000, scoped, tag = 'input window, operand 1, single buffered']
    #allocation6 [shape = 's32[1]{0}', space=sflag, size = 0x4, scoped, tag = 'scoped memory for tpu_custom_call.1']
    #allocation7 [shape = 'u8[32768]{0}', space=vmem, size = 0x8000, scoped, tag = 'output window, operand 0, single buffered']
    #allocation8 [shape = 'u8[4096]{0}', space=vmem, size = 0x1000, scoped, tag = 'output window, operand 1, single buffered']
    #allocation9 [shape = 's32[1]{0}', space=sflag, size = 0x4, scoped, tag = 'scoped memory for tpu_custom_call.1']
    %10 = vsyncpa [#allocation3], 0
    %11 = vsyncpa [#allocation6], 0
    %12 = vsyncpa [#allocation4], 0
    %13 = vsyncpa [#allocation9], 0
    // Predicated region
    $region2: #{tpu_custom_call.1} parent=1 // pred_check
      _
    $region3: #{tpu_custom_call.1} parent=1 // pred_check_branch
      %15 = sbr.rel (0) target = $region5
    $region4: #{tpu_custom_call.1} parent=1 // pred_region
      %s17 = ssub.s32 3072, 3072
      %18 = vsyncadd [#allocation3], %s17
      %s19 = sshll.u32 [#allocation2], 4
      %s20 = int_to_ptr.vmem [resolvable:$true] %s19
      %25 = dma.hbm_to_vmem [thread:$0]  %s0, 3072, %s20, [#allocation3], 384, 384, 24
    $region5: #{tpu_custom_call.1} parent=1 // pred_fallthru
      _
    // Predicated region
    $region6: #{tpu_custom_call.1} parent=1 // pred_check
      _
    $region7: #{tpu_custom_call.1} parent=1 // pred_check_branch
      %27 = sbr.rel (0) target = $region9
    $region8: #{tpu_custom_call.1} parent=1 // pred_region
      %s29 = ssub.s32 6144, 6144
      %30 = vsyncadd [#allocation6], %s29
      %s31 = sshll.u32 [#allocation5], 4
      %s32 = int_to_ptr.vmem [resolvable:$true] %s31
      %37 = dma.hbm_to_vmem [thread:$0]  %s1, 6144, %s32, [#allocation6], 384, 384, 24
    $region9: #{tpu_custom_call.1} parent=1 // pred_fallthru
      _
    // Predicated region
    $region10: #{tpu_custom_call.1} parent=1 // pred_check
      _
    $region11: #{tpu_custom_call.1} parent=1 // pred_check_branch
      %39 = sbr.rel (0) target = $region13
    $region12: #{tpu_custom_call.1} parent=1 // pred_region
      _
    $region13: #{tpu_custom_call.1} parent=1 // pred_fallthru
      _
    // Predicated region
    $region14: #{tpu_custom_call.1} parent=1 // pred_check
      _
    $region15: #{tpu_custom_call.1} parent=1 // pred_check_branch
      %41 = sbr.rel (0) target = $region17
    $region16: #{tpu_custom_call.1} parent=1 // pred_region
      %42 = dma.done [#allocation3], 3072
    $region17: #{tpu_custom_call.1} parent=1 // pred_fallthru
      _
    // Predicated region
    $region18: #{tpu_custom_call.1} parent=1 // pred_check
      _
    $region19: #{tpu_custom_call.1} parent=1 // pred_check_branch
      %44 = sbr.rel (0) target = $region21
    $region20: #{tpu_custom_call.1} parent=1 // pred_region
      %45 = dma.done [#allocation6], 6144
    $region21: #{tpu_custom_call.1} parent=1 // pred_fallthru
      _
    %v46 = vld [vmem:[#allocation5] sm:$0xff]
    %v47 = vld [vmem:[#allocation5 + $0x8] sm:$0xff]
    %v48 = vld [vmem:[#allocation5 + $0x10] sm:$0xff]
    %v49 = vld [vmem:[#allocation5 + $0x18] sm:$0xff]
    %v50 = vld [vmem:[#allocation5 + $0x20] sm:$0xff]
    %v51 = vld [vmem:[#allocation5 + $0x28] sm:$0xff]
    %v52 = vld [vmem:[#allocation5 + $0x30] sm:$0xff]
    %v53 = vld [vmem:[#allocation5 + $0x38] sm:$0xff]
    %v54 = vld [vmem:[#allocation5 + $0x40] sm:$0xff]
    %v55 = vld [vmem:[#allocation5 + $0x48] sm:$0xff]
    %v56 = vld [vmem:[#allocation5 + $0x50] sm:$0xff]
    %v57 = vld [vmem:[#allocation5 + $0x58] sm:$0xff]
    %v58 = vld [vmem:[#allocation5 + $0x60] sm:$0xff]
    %v59 = vld [vmem:[#allocation5 + $0x68] sm:$0xff]
    %v60 = vld [vmem:[#allocation5 + $0x70] sm:$0xff]
    %v61 = vld [vmem:[#allocation5 + $0x78] sm:$0xff]
    %v62 = vld [vmem:[#allocation5 + $0x80] sm:$0xff]
    %v63 = vld [vmem:[#allocation5 + $0x88] sm:$0xff]
    %v64 = vld [vmem:[#allocation5 + $0x90] sm:$0xff]
    %v65 = vld [vmem:[#allocation5 + $0x98] sm:$0xff]
    %v66 = vld [vmem:[#allocation5 + $0xa0] sm:$0xff]
    %v67 = vld [vmem:[#allocation5 + $0xa8] sm:$0xff]
    %v68 = vld [vmem:[#allocation5 + $0xb0] sm:$0xff]
    %v69 = vld [vmem:[#allocation5 + $0xb8] sm:$0xff]
    %v70 = vld [vmem:[#allocation5 + $0xc0] sm:$0xff]
    %v71 = vld [vmem:[#allocation5 + $0xc8] sm:$0xff]
    %v72 = vld [vmem:[#allocation5 + $0xd0] sm:$0xff]
    %v73 = vld [vmem:[#allocation5 + $0xd8] sm:$0xff]
    %v74 = vld [vmem:[#allocation5 + $0xe0] sm:$0xff]
    %v75 = vld [vmem:[#allocation5 + $0xe8] sm:$0xff]
    %v76 = vld [vmem:[#allocation5 + $0xf0] sm:$0xff]
    %v77 = vld [vmem:[#allocation5 + $0xf8] sm:$0xff]
    %v78 = vld [vmem:[#allocation5 + $0x100] sm:$0xff]
    %v79 = vld [vmem:[#allocation5 + $0x108] sm:$0xff]
    %v80 = vld [vmem:[#allocation5 + $0x110] sm:$0xff]
    %v81 = vld [vmem:[#allocation5 + $0x118] sm:$0xff]
    %v82 = vld [vmem:[#allocation5 + $0x120] sm:$0xff]
    %v83 = vld [vmem:[#allocation5 + $0x128] sm:$0xff]
    %v84 = vld [vmem:[#allocation5 + $0x130] sm:$0xff]
    %v85 = vld [vmem:[#allocation5 + $0x138] sm:$0xff]
    %v86 = vld [vmem:[#allocation5 + $0x140] sm:$0xff]
    %v87 = vld [vmem:[#allocation5 + $0x148] sm:$0xff]
    %v88 = vld [vmem:[#allocation5 + $0x150] sm:$0xff]
    %v89 = vld [vmem:[#allocation5 + $0x158] sm:$0xff]
    %v90 = vld [vmem:[#allocation5 + $0x160] sm:$0xff]
    %v91 = vld [vmem:[#allocation5 + $0x168] sm:$0xff]
    %v92 = vld [vmem:[#allocation5 + $0x170] sm:$0xff]
    %v93 = vld [vmem:[#allocation5 + $0x178] sm:$0xff]
    %v94 = vld [vmem:[%s2] sm:$0x7]
    %v96 = vlaneseq
    %v97 = vshrl.u32 %v96, 7
    %v98 = vsub.s32 0, %v97
    %v99 = vrot.slane %v94, %v98
    %v100 = vlaneseq
    %v101 = vshrl.u32 %v100, 7
    %v102 = vsub.s32 1, %v101
    %v103 = vrot.slane %v94, %v102
    %v104 = vlaneseq
    %v105 = vshrl.u32 %v104, 7
    %v106 = vsub.s32 2, %v105
    %v107 = vrot.slane %v94, %v106
    %111 = vmatprep.subr.mxu0 %v92
    %112 = vmatpush1.msra.mxu0 %v91
    %113 = vmatprep.subr.mxu0 %v89
    %114 = vmatpush1.msra.mxu0 %v88
    %115 = vmatprep.subr.mxu0 %v86
    %116 = vmatpush1.msra.mxu0 %v85
    %117 = vmatprep.subr.mxu0 %v83
    %118 = vmatpush1.msra.mxu0 %v82
    %119 = vmatprep.subr.mxu0 %v80
    %120 = vmatpush1.msra.mxu0 %v79
    %121 = vmatprep.subr.mxu0 %v77
    %122 = vmatpush1.msra.mxu0 %v76
    %123 = vmatprep.subr.mxu0 %v74
    %124 = vmatpush1.msra.mxu0 %v73
    %125 = vmatprep.subr.mxu0 %v71
    %126 = vmatpush1.msra.mxu0 %v70
    %127 = vmatprep.subr.mxu0 %v68
    %128 = vmatpush1.msra.mxu0 %v67
    %129 = vmatprep.subr.mxu0 %v65
    %130 = vmatpush1.msra.mxu0 %v64
    %131 = vmatprep.subr.mxu0 %v62
    %132 = vmatpush1.msra.mxu0 %v61
    %133 = vmatprep.subr.mxu0 %v59
    %134 = vmatpush1.msra.mxu0 %v58
    %135 = vmatprep.subr.mxu0 %v56
    %136 = vmatpush1.msra.mxu0 %v55
    %137 = vmatprep.subr.mxu0 %v53
    %138 = vmatpush1.msra.mxu0 %v52
    %139 = vmatprep.subr.mxu0 %v50
    %140 = vmatpush1.msra.mxu0 %v49
    %141 = vmatprep.subr.mxu0 %v47
    %142 = vmatpush1.msra.mxu0 %v46
    %143 = vmatprep.subr.mxu0 0.0
    %144 = vmatpush2.msra.mxu0 0.0
    %145 = vmatprep.subr.mxu0 0.0
    %146 = vmatpush2.msra.mxu0 0.0
    %147 = vmatprep.subr.mxu0 0.0
    %148 = vmatpush2.msra.mxu0 0.0
    %149 = vmatprep.subr.mxu0 0.0
    %150 = vmatpush2.msra.mxu0 0.0
    %151 = vmatprep.subr.mxu0 0.0
    %152 = vmatpush2.msra.mxu0 0.0
    %153 = vmatprep.subr.mxu0 0.0
    %154 = vmatpush2.msra.mxu0 0.0
    %155 = vmatprep.subr.mxu0 0.0
    %156 = vmatpush2.msra.mxu0 0.0
    %157 = vmatprep.subr.mxu0 0.0
    %158 = vmatpush2.msra.mxu0 0.0
    %159 = vmatprep.subr.mxu0 0.0
    %160 = vmatpush2.msra.mxu0 0.0
    %161 = vmatprep.subr.mxu0 0.0
    %162 = vmatpush2.msra.mxu0 0.0
    %163 = vmatprep.subr.mxu0 0.0
    %164 = vmatpush2.msra.mxu0 0.0
    %165 = vmatprep.subr.mxu0 0.0
    %166 = vmatpush2.msra.mxu0 0.0
    %167 = vmatprep.subr.mxu0 0.0
    %168 = vmatpush2.msra.mxu0 0.0
    %169 = vmatprep.subr.mxu0 0.0
    %170 = vmatpush2.msra.mxu0 0.0
    %171 = vmatprep.subr.mxu0 0.0
    %172 = vmatpush2.msra.mxu0 0.0
    %173 = vmatprep.subr.mxu0 0.0
    %174 = vmatpush2.msra.mxu0 0.0
    %175 = vmatprep.mubr.f32.mxu0 0.0
    %176 = vmatmul.mubr.f32.gmra.mxu0 0.0
    %v177 = vpop.f32.mrf.mxu0
    %v178 = vadd.f32 %v99, %v177
    %v179 = vpop.f32.mrf.mxu0
    %v180 = vadd.f32 %v103, %v179
    %181 = vdwg.mxu0
    %182 = vmatprep.subr.mxu0 0.0
    %183 = vmatpush1.msra.mxu0 %v93
    %184 = vmatprep.subr.mxu0 0.0
    %185 = vmatpush1.msra.mxu0 %v90
    %186 = vmatprep.subr.mxu0 0.0
    %187 = vmatpush1.msra.mxu0 %v87
    %188 = vmatprep.subr.mxu0 0.0
    %189 = vmatpush1.msra.mxu0 %v84
    %190 = vmatprep.subr.mxu0 0.0
    %191 = vmatpush1.msra.mxu0 %v81
    %192 = vmatprep.subr.mxu0 0.0
    %193 = vmatpush1.msra.mxu0 %v78
    %194 = vmatprep.subr.mxu0 0.0
    %195 = vmatpush1.msra.mxu0 %v75
    %196 = vmatprep.subr.mxu0 0.0
    %197 = vmatpush1.msra.mxu0 %v72
    %198 = vmatprep.subr.mxu0 0.0
    %199 = vmatpush1.msra.mxu0 %v69
    %200 = vmatprep.subr.mxu0 0.0
    %201 = vmatpush1.msra.mxu0 %v66
    %202 = vmatprep.subr.mxu0 0.0
    %203 = vmatpush1.msra.mxu0 %v63
    %204 = vmatprep.subr.mxu0 0.0
    %205 = vmatpush1.msra.mxu0 %v60
    %206 = vmatprep.subr.mxu0 0.0
    %207 = vmatpush1.msra.mxu0 %v57
    %208 = vmatprep.subr.mxu0 0.0
    %209 = vmatpush1.msra.mxu0 %v54
    %210 = vmatprep.subr.mxu0 0.0
    %211 = vmatpush1.msra.mxu0 %v51
    %212 = vmatprep.subr.mxu0 0.0
    %213 = vmatpush1.msra.mxu0 %v48
    %214 = vmatprep.subr.mxu0 0.0
    %215 = vmatpush2.msra.mxu0 0.0
    %216 = vmatprep.subr.mxu0 0.0
    %217 = vmatpush2.msra.mxu0 0.0
    %218 = vmatprep.subr.mxu0 0.0
    %219 = vmatpush2.msra.mxu0 0.0
    %220 = vmatprep.subr.mxu0 0.0
    %221 = vmatpush2.msra.mxu0 0.0
    %222 = vmatprep.subr.mxu0 0.0
    %223 = vmatpush2.msra.mxu0 0.0
    %224 = vmatprep.subr.mxu0 0.0
    %225 = vmatpush2.msra.mxu0 0.0
    %226 = vmatprep.subr.mxu0 0.0
    %227 = vmatpush2.msra.mxu0 0.0
    %228 = vmatprep.subr.mxu0 0.0
    %229 = vmatpush2.msra.mxu0 0.0
    %230 = vmatprep.subr.mxu0 0.0
    %231 = vmatpush2.msra.mxu0 0.0
    %232 = vmatprep.subr.mxu0 0.0
    %233 = vmatpush2.msra.mxu0 0.0
    %234 = vmatprep.subr.mxu0 0.0
    %235 = vmatpush2.msra.mxu0 0.0
    %236 = vmatprep.subr.mxu0 0.0
    %237 = vmatpush2.msra.mxu0 0.0
    %238 = vmatprep.subr.mxu0 0.0
    %239 = vmatpush2.msra.mxu0 0.0
    %240 = vmatprep.subr.mxu0 0.0
    %241 = vmatpush2.msra.mxu0 0.0
    %242 = vmatprep.subr.mxu0 0.0
    %243 = vmatpush2.msra.mxu0 0.0
    %244 = vmatprep.subr.mxu0 0.0
    %245 = vmatpush2.msra.mxu0 0.0
    %246 = vmatprep.mubr.f32.mxu0 0.0
    %247 = vmatmul.mubr.f32.gmra.mxu0 0.0
    %v248 = vpop.f32.mrf.mxu0
    %v249 = vadd.f32 %v107, %v248
    %v250 = vpop.f32.mrf.mxu0
    %251 = vdwg.mxu0
    %v252 = vld [vmem:[#allocation2] sm:$0xff]
    %v253 = vld [vmem:[#allocation2 + $0x8] sm:$0xff]
    %v254 = vld [vmem:[#allocation2 + $0x10] sm:$0xff]
    %v255 = vadd.f32 %v252, %v178
    %v256 = vxor.u32 %v255, 2147483648
    %v257 = vmul.f32 %v256, 1.442695
    %v258 = vpow.pop %v257
    %v259 = vadd.f32 %v258, 1.0
    %v260 = vrcp.pop %v259
    %v261 = vmul.f32 1.0, %v260
    %v262 = vadd.f32 %v253, %v180
    %v263 = vxor.u32 %v262, 2147483648
    %v264 = vmul.f32 %v263, 1.442695
    %v265 = vpow.pop %v264
    %v266 = vadd.f32 %v265, 1.0
    %v267 = vrcp.pop %v266
    %v268 = vmul.f32 1.0, %v267
    %v269 = vmul.f32 %v261, %v249
    %v270 = vadd.f32 %v254, %v269
    %v271 = vtanh.pop %v270
    %v272 = vsub.f32 1.0, %v268
    %v273 = vmul.f32 %v272, %v271
    %v274 = vmul.f32 %v268, 0.0
    %v275 = vadd.f32 %v273, %v274
    %276 = vst [vmem:[#allocation7] sm:$0xff] %v275
    %277 = vmatprep.subr.mxu0 %v92
    %278 = vmatpush1.msra.mxu0 %v91
    %279 = vmatprep.subr.mxu0 %v89
    %280 = vmatpush1.msra.mxu0 %v88
    %281 = vmatprep.subr.mxu0 %v86
    %282 = vmatpush1.msra.mxu0 %v85
    %283 = vmatprep.subr.mxu0 %v83
    %284 = vmatpush1.msra.mxu0 %v82
    %285 = vmatprep.subr.mxu0 %v80
    %286 = vmatpush1.msra.mxu0 %v79
    %287 = vmatprep.subr.mxu0 %v77
    %288 = vmatpush1.msra.mxu0 %v76
    %289 = vmatprep.subr.mxu0 %v74
    %290 = vmatpush1.msra.mxu0 %v73
    %291 = vmatprep.subr.mxu0 %v71
    %292 = vmatpush1.msra.mxu0 %v70
    %293 = vmatprep.subr.mxu0 %v68
    %294 = vmatpush1.msra.mxu0 %v67
    %295 = vmatprep.subr.mxu0 %v65
    %296 = vmatpush1.msra.mxu0 %v64
    %297 = vmatprep.subr.mxu0 %v62
    %298 = vmatpush1.msra.mxu0 %v61
    %299 = vmatprep.subr.mxu0 %v59
    %300 = vmatpush1.msra.mxu0 %v58
    %301 = vmatprep.subr.mxu0 %v56
    %302 = vmatpush1.msra.mxu0 %v55
    %303 = vmatprep.subr.mxu0 %v53
    %304 = vmatpush1.msra.mxu0 %v52
    %305 = vmatprep.subr.mxu0 %v50
    %306 = vmatpush1.msra.mxu0 %v49
    %307 = vmatprep.subr.mxu0 %v47
    %308 = vmatpush1.msra.mxu0 %v46
    %309 = vmatprep.subr.mxu0 0.0
    %310 = vmatpush2.msra.mxu0 0.0
    %311 = vmatprep.subr.mxu0 0.0
    %312 = vmatpush2.msra.mxu0 0.0
    %313 = vmatprep.subr.mxu0 0.0
    %314 = vmatpush2.msra.mxu0 0.0
    %315 = vmatprep.subr.mxu0 0.0
    %316 = vmatpush2.msra.mxu0 0.0
    %317 = vmatprep.subr.mxu0 0.0
    %318 = vmatpush2.msra.mxu0 0.0
    %319 = vmatprep.subr.mxu0 0.0
    %320 = vmatpush2.msra.mxu0 0.0
    %321 = vmatprep.subr.mxu0 0.0
    %322 = vmatpush2.msra.mxu0 0.0
    %323 = vmatprep.subr.mxu0 0.0
    %324 = vmatpush2.msra.mxu0 0.0
    %325 = vmatprep.subr.mxu0 0.0
    %326 = vmatpush2.msra.mxu0 0.0
    %327 = vmatprep.subr.mxu0 0.0
    %328 = vmatpush2.msra.mxu0 0.0
    %329 = vmatprep.subr.mxu0 0.0
    %330 = vmatpush2.msra.mxu0 0.0
    %331 = vmatprep.subr.mxu0 0.0
    %332 = vmatpush2.msra.mxu0 0.0
    %333 = vmatprep.subr.mxu0 0.0
    %334 = vmatpush2.msra.mxu0 0.0
    %335 = vmatprep.subr.mxu0 0.0
    %336 = vmatpush2.msra.mxu0 0.0
    %337 = vmatprep.subr.mxu0 0.0
    %338 = vmatpush2.msra.mxu0 0.0
    %339 = vmatprep.subr.mxu0 0.0
    %340 = vmatpush2.msra.mxu0 0.0
    %341 = vmatprep.mubr.f32.mxu0 0.0
    %342 = vmatmul.mubr.f32.gmra.mxu0 %v275
    %v343 = vpop.f32.mrf.mxu0
    %v344 = vadd.f32 %v99, %v343
    %v345 = vpop.f32.mrf.mxu0
    %v346 = vadd.f32 %v103, %v345
    %347 = vdwg.mxu0
    %348 = vmatprep.subr.mxu0 0.0
    %349 = vmatpush1.msra.mxu0 %v93
    %350 = vmatprep.subr.mxu0 0.0
    %351 = vmatpush1.msra.mxu0 %v90
    %352 = vmatprep.subr.mxu0 0.0
    %353 = vmatpush1.msra.mxu0 %v87
    %354 = vmatprep.subr.mxu0 0.0
    %355 = vmatpush1.msra.mxu0 %v84
    %356 = vmatprep.subr.mxu0 0.0
    %357 = vmatpush1.msra.mxu0 %v81
    %358 = vmatprep.subr.mxu0 0.0
    %359 = vmatpush1.msra.mxu0 %v78
    %360 = vmatprep.subr.mxu0 0.0
    %361 = vmatpush1.msra.mxu0 %v75
    %362 = vmatprep.subr.mxu0 0.0
    %363 = vmatpush1.msra.mxu0 %v72
    %364 = vmatprep.subr.mxu0 0.0
    %365 = vmatpush1.msra.mxu0 %v69
    %366 = vmatprep.subr.mxu0 0.0
    %367 = vmatpush1.msra.mxu0 %v66
    %368 = vmatprep.subr.mxu0 0.0
    %369 = vmatpush1.msra.mxu0 %v63
    %370 = vmatprep.subr.mxu0 0.0
    %371 = vmatpush1.msra.mxu0 %v60
    %372 = vmatprep.subr.mxu0 0.0
    %373 = vmatpush1.msra.mxu0 %v57
    %374 = vmatprep.subr.mxu0 0.0
    %375 = vmatpush1.msra.mxu0 %v54
    %376 = vmatprep.subr.mxu0 0.0
    %377 = vmatpush1.msra.mxu0 %v51
    %378 = vmatprep.subr.mxu0 0.0
    %379 = vmatpush1.msra.mxu0 %v48
    %380 = vmatprep.subr.mxu0 0.0
    %381 = vmatpush2.msra.mxu0 0.0
    %382 = vmatprep.subr.mxu0 0.0
    %383 = vmatpush2.msra.mxu0 0.0
    %384 = vmatprep.subr.mxu0 0.0
    %385 = vmatpush2.msra.mxu0 0.0
    %386 = vmatprep.subr.mxu0 0.0
    %387 = vmatpush2.msra.mxu0 0.0
    %388 = vmatprep.subr.mxu0 0.0
    %389 = vmatpush2.msra.mxu0 0.0
    %390 = vmatprep.subr.mxu0 0.0
    %391 = vmatpush2.msra.mxu0 0.0
    %392 = vmatprep.subr.mxu0 0.0
    %393 = vmatpush2.msra.mxu0 0.0
    %394 = vmatprep.subr.mxu0 0.0
    %395 = vmatpush2.msra.mxu0 0.0
    %396 = vmatprep.subr.mxu0 0.0
    %397 = vmatpush2.msra.mxu0 0.0
    %398 = vmatprep.subr.mxu0 0.0
    %399 = vmatpush2.msra.mxu0 0.0
    %400 = vmatprep.subr.mxu0 0.0
    %401 = vmatpush2.msra.mxu0 0.0
    %402 = vmatprep.subr.mxu0 0.0
    %403 = vmatpush2.msra.mxu0 0.0
    %404 = vmatprep.subr.mxu0 0.0
    %405 = vmatpush2.msra.mxu0 0.0
    %406 = vmatprep.subr.mxu0 0.0
    %407 = vmatpush2.msra.mxu0 0.0
    %408 = vmatprep.subr.mxu0 0.0
    %409 = vmatpush2.msra.mxu0 0.0
    %410 = vmatprep.subr.mxu0 0.0
    %411 = vmatpush2.msra.mxu0 0.0
    %412 = vmatprep.mubr.f32.mxu0 0.0
    %413 = vmatmul.mubr.f32.gmra.mxu0 %v275
    %v414 = vpop.f32.mrf.mxu0
    %v415 = vadd.f32 %v107, %v414
    %v416 = vpop.f32.mrf.mxu0
    %417 = vdwg.mxu0
    %s418 = scalar_lea.vmem [#allocation2], 24
    %v419 = vld [vmem:[%s418] sm:$0xff]
    %v420 = vld [vmem:[%s418 + $0x8] sm:$0xff]
    %v421 = vld [vmem:[%s418 + $0x10] sm:$0xff]
    %v422 = vadd.f32 %v419, %v344
    %v423 = vxor.u32 %v422, 2147483648
    %v424 = vmul.f32 %v423, 1.442695
    %v425 = vpow.pop %v424
    %v426 = vadd.f32 %v425, 1.0
    %v427 = vrcp.pop %v426
    %v428 = vmul.f32 1.0, %v427
    %v429 = vadd.f32 %v420, %v346
    %v430 = vxor.u32 %v429, 2147483648
    %v431 = vmul.f32 %v430, 1.442695
    %v432 = vpow.pop %v431
    %v433 = vadd.f32 %v432, 1.0
    %v434 = vrcp.pop %v433
    %v435 = vmul.f32 1.0, %v434
    %v436 = vmul.f32 %v428, %v415
    %v437 = vadd.f32 %v421, %v436
    %v438 = vtanh.pop %v437
    %v439 = vsub.f32 1.0, %v435
    %v440 = vmul.f32 %v439, %v438
    %v441 = vmul.f32 %v435, %v275
    %v442 = vadd.f32 %v440, %v441
    %s443 = scalar_lea.vmem [#allocation7], 8
    %444 = vst [vmem:[%s443] sm:$0xff] %v442
    %445 = vmatprep.subr.mxu0 %v92
    %446 = vmatpush1.msra.mxu0 %v91
    %447 = vmatprep.subr.mxu0 %v89
    %448 = vmatpush1.msra.mxu0 %v88
    %449 = vmatprep.subr.mxu0 %v86
    %450 = vmatpush1.msra.mxu0 %v85
    %451 = vmatprep.subr.mxu0 %v83
    %452 = vmatpush1.msra.mxu0 %v82
    %453 = vmatprep.subr.mxu0 %v80
    %454 = vmatpush1.msra.mxu0 %v79
    %455 = vmatprep.subr.mxu0 %v77
    %456 = vmatpush1.msra.mxu0 %v76
    %457 = vmatprep.subr.mxu0 %v74
    %458 = vmatpush1.msra.mxu0 %v73
    %459 = vmatprep.subr.mxu0 %v71
    %460 = vmatpush1.msra.mxu0 %v70
    %461 = vmatprep.subr.mxu0 %v68
    %462 = vmatpush1.msra.mxu0 %v67
    %463 = vmatprep.subr.mxu0 %v65
    %464 = vmatpush1.msra.mxu0 %v64
    %465 = vmatprep.subr.mxu0 %v62
    %466 = vmatpush1.msra.mxu0 %v61
    %467 = vmatprep.subr.mxu0 %v59
    %468 = vmatpush1.msra.mxu0 %v58
    %469 = vmatprep.subr.mxu0 %v56
    %470 = vmatpush1.msra.mxu0 %v55
    %471 = vmatprep.subr.mxu0 %v53
    %472 = vmatpush1.msra.mxu0 %v52
    %473 = vmatprep.subr.mxu0 %v50
    %474 = vmatpush1.msra.mxu0 %v49
    %475 = vmatprep.subr.mxu0 %v47
    %476 = vmatpush1.msra.mxu0 %v46
    %477 = vmatprep.subr.mxu0 0.0
    %478 = vmatpush2.msra.mxu0 0.0
    %479 = vmatprep.subr.mxu0 0.0
    %480 = vmatpush2.msra.mxu0 0.0
    %481 = vmatprep.subr.mxu0 0.0
    %482 = vmatpush2.msra.mxu0 0.0
    %483 = vmatprep.subr.mxu0 0.0
    %484 = vmatpush2.msra.mxu0 0.0
    %485 = vmatprep.subr.mxu0 0.0
    %486 = vmatpush2.msra.mxu0 0.0
    %487 = vmatprep.subr.mxu0 0.0
    %488 = vmatpush2.msra.mxu0 0.0
    %489 = vmatprep.subr.mxu0 0.0
    %490 = vmatpush2.msra.mxu0 0.0
    %491 = vmatprep.subr.mxu0 0.0
    %492 = vmatpush2.msra.mxu0 0.0
    %493 = vmatprep.subr.mxu0 0.0
    %494 = vmatpush2.msra.mxu0 0.0
    %495 = vmatprep.subr.mxu0 0.0
    %496 = vmatpush2.msra.mxu0 0.0
    %497 = vmatprep.subr.mxu0 0.0
    %498 = vmatpush2.msra.mxu0 0.0
    %499 = vmatprep.subr.mxu0 0.0
    %500 = vmatpush2.msra.mxu0 0.0
    %501 = vmatprep.subr.mxu0 0.0
    %502 = vmatpush2.msra.mxu0 0.0
    %503 = vmatprep.subr.mxu0 0.0
    %504 = vmatpush2.msra.mxu0 0.0
    %505 = vmatprep.subr.mxu0 0.0
    %506 = vmatpush2.msra.mxu0 0.0
    %507 = vmatprep.subr.mxu0 0.0
    %508 = vmatpush2.msra.mxu0 0.0
    %509 = vmatprep.mubr.f32.mxu0 0.0
    %510 = vmatmul.mubr.f32.gmra.mxu0 %v442
    %v511 = vpop.f32.mrf.mxu0
    %v512 = vadd.f32 %v99, %v511
    %v513 = vpop.f32.mrf.mxu0
    %v514 = vadd.f32 %v103, %v513
    %515 = vdwg.mxu0
    %516 = vmatprep.subr.mxu0 0.0
    %517 = vmatpush1.msra.mxu0 %v93
    %518 = vmatprep.subr.mxu0 0.0
    %519 = vmatpush1.msra.mxu0 %v90
    %520 = vmatprep.subr.mxu0 0.0
    %521 = vmatpush1.msra.mxu0 %v87
    %522 = vmatprep.subr.mxu0 0.0
    %523 = vmatpush1.msra.mxu0 %v84
    %524 = vmatprep.subr.mxu0 0.0
    %525 = vmatpush1.msra.mxu0 %v81
    %526 = vmatprep.subr.mxu0 0.0
    %527 = vmatpush1.msra.mxu0 %v78
    %528 = vmatprep.subr.mxu0 0.0
    %529 = vmatpush1.msra.mxu0 %v75
    %530 = vmatprep.subr.mxu0 0.0
    %531 = vmatpush1.msra.mxu0 %v72
    %532 = vmatprep.subr.mxu0 0.0
    %533 = vmatpush1.msra.mxu0 %v69
    %534 = vmatprep.subr.mxu0 0.0
    %535 = vmatpush1.msra.mxu0 %v66
    %536 = vmatprep.subr.mxu0 0.0
    %537 = vmatpush1.msra.mxu0 %v63
    %538 = vmatprep.subr.mxu0 0.0
    %539 = vmatpush1.msra.mxu0 %v60
    %540 = vmatprep.subr.mxu0 0.0
    %541 = vmatpush1.msra.mxu0 %v57
    %542 = vmatprep.subr.mxu0 0.0
    %543 = vmatpush1.msra.mxu0 %v54
    %544 = vmatprep.subr.mxu0 0.0
    %545 = vmatpush1.msra.mxu0 %v51
    %546 = vmatprep.subr.mxu0 0.0
    %547 = vmatpush1.msra.mxu0 %v48
    %548 = vmatprep.subr.mxu0 0.0
    %549 = vmatpush2.msra.mxu0 0.0
    %550 = vmatprep.subr.mxu0 0.0
    %551 = vmatpush2.msra.mxu0 0.0
    %552 = vmatprep.subr.mxu0 0.0
    %553 = vmatpush2.msra.mxu0 0.0
    %554 = vmatprep.subr.mxu0 0.0
    %555 = vmatpush2.msra.mxu0 0.0
    %556 = vmatprep.subr.mxu0 0.0
    %557 = vmatpush2.msra.mxu0 0.0
    %558 = vmatprep.subr.mxu0 0.0
    %559 = vmatpush2.msra.mxu0 0.0
    %560 = vmatprep.subr.mxu0 0.0
    %561 = vmatpush2.msra.mxu0 0.0
    %562 = vmatprep.subr.mxu0 0.0
    %563 = vmatpush2.msra.mxu0 0.0
    %564 = vmatprep.subr.mxu0 0.0
    %565 = vmatpush2.msra.mxu0 0.0
    %566 = vmatprep.subr.mxu0 0.0
    %567 = vmatpush2.msra.mxu0 0.0
    %568 = vmatprep.subr.mxu0 0.0
    %569 = vmatpush2.msra.mxu0 0.0
    %570 = vmatprep.subr.mxu0 0.0
    %571 = vmatpush2.msra.mxu0 0.0
    %572 = vmatprep.subr.mxu0 0.0
    %573 = vmatpush2.msra.mxu0 0.0
    %574 = vmatprep.subr.mxu0 0.0
    %575 = vmatpush2.msra.mxu0 0.0
    %576 = vmatprep.subr.mxu0 0.0
    %577 = vmatpush2.msra.mxu0 0.0
    %578 = vmatprep.subr.mxu0 0.0
    %579 = vmatpush2.msra.mxu0 0.0
    %580 = vmatprep.mubr.f32.mxu0 0.0
    %581 = vmatmul.mubr.f32.gmra.mxu0 %v442
    %v582 = vpop.f32.mrf.mxu0
    %v583 = vadd.f32 %v107, %v582
    %v584 = vpop.f32.mrf.mxu0
    %585 = vdwg.mxu0
    %s586 = scalar_lea.vmem [#allocation2], 48
    %v587 = vld [vmem:[%s586] sm:$0xff]
    %v588 = vld [vmem:[%s586 + $0x8] sm:$0xff]
    %v589 = vld [vmem:[%s586 + $0x10] sm:$0xff]
    %v590 = vadd.f32 %v587, %v512
    %v591 = vxor.u32 %v590, 2147483648
    %v592 = vmul.f32 %v591, 1.442695
    %v593 = vpow.pop %v592
    %v594 = vadd.f32 %v593, 1.0
    %v595 = vrcp.pop %v594
    %v596 = vmul.f32 1.0, %v595
    %v597 = vadd.f32 %v588, %v514
    %v598 = vxor.u32 %v597, 2147483648
    %v599 = vmul.f32 %v598, 1.442695
    %v600 = vpow.pop %v599
    %v601 = vadd.f32 %v600, 1.0
    %v602 = vrcp.pop %v601
    %v603 = vmul.f32 1.0, %v602
    %v604 = vmul.f32 %v596, %v583
    %v605 = vadd.f32 %v589, %v604
    %v606 = vtanh.pop %v605
    %v607 = vsub.f32 1.0, %v603
    %v608 = vmul.f32 %v607, %v606
    %v609 = vmul.f32 %v603, %v442
    %v610 = vadd.f32 %v608, %v609
    %s611 = scalar_lea.vmem [#allocation7], 16
    %612 = vst [vmem:[%s611] sm:$0xff] %v610
    %613 = vmatprep.subr.mxu0 %v92
    %614 = vmatpush1.msra.mxu0 %v91
    %615 = vmatprep.subr.mxu0 %v89
    %616 = vmatpush1.msra.mxu0 %v88
    %617 = vmatprep.subr.mxu0 %v86
    %618 = vmatpush1.msra.mxu0 %v85
    %619 = vmatprep.subr.mxu0 %v83
    %620 = vmatpush1.msra.mxu0 %v82
    %621 = vmatprep.subr.mxu0 %v80
    %622 = vmatpush1.msra.mxu0 %v79
    %623 = vmatprep.subr.mxu0 %v77
    %624 = vmatpush1.msra.mxu0 %v76
    %625 = vmatprep.subr.mxu0 %v74
    %626 = vmatpush1.msra.mxu0 %v73
    %627 = vmatprep.subr.mxu0 %v71
    %628 = vmatpush1.msra.mxu0 %v70
    %629 = vmatprep.subr.mxu0 %v68
    %630 = vmatpush1.msra.mxu0 %v67
    %631 = vmatprep.subr.mxu0 %v65
    %632 = vmatpush1.msra.mxu0 %v64
    %633 = vmatprep.subr.mxu0 %v62
    %634 = vmatpush1.msra.mxu0 %v61
    %635 = vmatprep.subr.mxu0 %v59
    %636 = vmatpush1.msra.mxu0 %v58
    %637 = vmatprep.subr.mxu0 %v56
    %638 = vmatpush1.msra.mxu0 %v55
    %639 = vmatprep.subr.mxu0 %v53
    %640 = vmatpush1.msra.mxu0 %v52
    %641 = vmatprep.subr.mxu0 %v50
    %642 = vmatpush1.msra.mxu0 %v49
    %643 = vmatprep.subr.mxu0 %v47
    %644 = vmatpush1.msra.mxu0 %v46
    %645 = vmatprep.subr.mxu0 0.0
    %646 = vmatpush2.msra.mxu0 0.0
    %647 = vmatprep.subr.mxu0 0.0
    %648 = vmatpush2.msra.mxu0 0.0
    %649 = vmatprep.subr.mxu0 0.0
    %650 = vmatpush2.msra.mxu0 0.0
    %651 = vmatprep.subr.mxu0 0.0
    %652 = vmatpush2.msra.mxu0 0.0
    %653 = vmatprep.subr.mxu0 0.0
    %654 = vmatpush2.msra.mxu0 0.0
    %655 = vmatprep.subr.mxu0 0.0
    %656 = vmatpush2.msra.mxu0 0.0
    %657 = vmatprep.subr.mxu0 0.0
    %658 = vmatpush2.msra.mxu0 0.0
    %659 = vmatprep.subr.mxu0 0.0
    %660 = vmatpush2.msra.mxu0 0.0
    %661 = vmatprep.subr.mxu0 0.0
    %662 = vmatpush2.msra.mxu0 0.0
    %663 = vmatprep.subr.mxu0 0.0
    %664 = vmatpush2.msra.mxu0 0.0
    %665 = vmatprep.subr.mxu0 0.0
    %666 = vmatpush2.msra.mxu0 0.0
    %667 = vmatprep.subr.mxu0 0.0
    %668 = vmatpush2.msra.mxu0 0.0
    %669 = vmatprep.subr.mxu0 0.0
    %670 = vmatpush2.msra.mxu0 0.0
    %671 = vmatprep.subr.mxu0 0.0
    %672 = vmatpush2.msra.mxu0 0.0
    %673 = vmatprep.subr.mxu0 0.0
    %674 = vmatpush2.msra.mxu0 0.0
    %675 = vmatprep.subr.mxu0 0.0
    %676 = vmatpush2.msra.mxu0 0.0
    %677 = vmatprep.mubr.f32.mxu0 0.0
    %678 = vmatmul.mubr.f32.gmra.mxu0 %v610
    %v679 = vpop.f32.mrf.mxu0
    %v680 = vadd.f32 %v99, %v679
    %v681 = vpop.f32.mrf.mxu0
    %v682 = vadd.f32 %v103, %v681
    %683 = vdwg.mxu0
    %684 = vmatprep.subr.mxu0 0.0
    %685 = vmatpush1.msra.mxu0 %v93
    %686 = vmatprep.subr.mxu0 0.0
    %687 = vmatpush1.msra.mxu0 %v90
    %688 = vmatprep.subr.mxu0 0.0
    %689 = vmatpush1.msra.mxu0 %v87
    %690 = vmatprep.subr.mxu0 0.0
    %691 = vmatpush1.msra.mxu0 %v84
    %692 = vmatprep.subr.mxu0 0.0
    %693 = vmatpush1.msra.mxu0 %v81
    %694 = vmatprep.subr.mxu0 0.0
    %695 = vmatpush1.msra.mxu0 %v78
    %696 = vmatprep.subr.mxu0 0.0
    %697 = vmatpush1.msra.mxu0 %v75
    %698 = vmatprep.subr.mxu0 0.0
    %699 = vmatpush1.msra.mxu0 %v72
    %700 = vmatprep.subr.mxu0 0.0
    %701 = vmatpush1.msra.mxu0 %v69
    %702 = vmatprep.subr.mxu0 0.0
    %703 = vmatpush1.msra.mxu0 %v66
    %704 = vmatprep.subr.mxu0 0.0
    %705 = vmatpush1.msra.mxu0 %v63
    %706 = vmatprep.subr.mxu0 0.0
    %707 = vmatpush1.msra.mxu0 %v60
    %708 = vmatprep.subr.mxu0 0.0
    %709 = vmatpush1.msra.mxu0 %v57
    %710 = vmatprep.subr.mxu0 0.0
    %711 = vmatpush1.msra.mxu0 %v54
    %712 = vmatprep.subr.mxu0 0.0
    %713 = vmatpush1.msra.mxu0 %v51
    %714 = vmatprep.subr.mxu0 0.0
    %715 = vmatpush1.msra.mxu0 %v48
    %716 = vmatprep.subr.mxu0 0.0
    %717 = vmatpush2.msra.mxu0 0.0
    %718 = vmatprep.subr.mxu0 0.0
    %719 = vmatpush2.msra.mxu0 0.0
    %720 = vmatprep.subr.mxu0 0.0
    %721 = vmatpush2.msra.mxu0 0.0
    %722 = vmatprep.subr.mxu0 0.0
    %723 = vmatpush2.msra.mxu0 0.0
    %724 = vmatprep.subr.mxu0 0.0
    %725 = vmatpush2.msra.mxu0 0.0
    %726 = vmatprep.subr.mxu0 0.0
    %727 = vmatpush2.msra.mxu0 0.0
    %728 = vmatprep.subr.mxu0 0.0
    %729 = vmatpush2.msra.mxu0 0.0
    %730 = vmatprep.subr.mxu0 0.0
    %731 = vmatpush2.msra.mxu0 0.0
    %732 = vmatprep.subr.mxu0 0.0
    %733 = vmatpush2.msra.mxu0 0.0
    %734 = vmatprep.subr.mxu0 0.0
    %735 = vmatpush2.msra.mxu0 0.0
    %736 = vmatprep.subr.mxu0 0.0
    %737 = vmatpush2.msra.mxu0 0.0
    %738 = vmatprep.subr.mxu0 0.0
    %739 = vmatpush2.msra.mxu0 0.0
    %740 = vmatprep.subr.mxu0 0.0
    %741 = vmatpush2.msra.mxu0 0.0
    %742 = vmatprep.subr.mxu0 0.0
    %743 = vmatpush2.msra.mxu0 0.0
    %744 = vmatprep.subr.mxu0 0.0
    %745 = vmatpush2.msra.mxu0 0.0
    %746 = vmatprep.subr.mxu0 0.0
    %747 = vmatpush2.msra.mxu0 0.0
    %748 = vmatprep.mubr.f32.mxu0 0.0
    %749 = vmatmul.mubr.f32.gmra.mxu0 %v610
    %v750 = vpop.f32.mrf.mxu0
    %v751 = vadd.f32 %v107, %v750
    %v752 = vpop.f32.mrf.mxu0
    %753 = vdwg.mxu0
    %s754 = scalar_lea.vmem [#allocation2], 72
    %v755 = vld [vmem:[%s754] sm:$0xff]
    %v756 = vld [vmem:[%s754 + $0x8] sm:$0xff]
    %v757 = vld [vmem:[%s754 + $0x10] sm:$0xff]
    %v758 = vadd.f32 %v755, %v680
    %v759 = vxor.u32 %v758, 2147483648
    %v760 = vmul.f32 %v759, 1.442695
    %v761 = vpow.pop %v760
    %v762 = vadd.f32 %v761, 1.0
    %v763 = vrcp.pop %v762
    %v764 = vmul.f32 1.0, %v763
    %v765 = vadd.f32 %v756, %v682
    %v766 = vxor.u32 %v765, 2147483648
    %v767 = vmul.f32 %v766, 1.442695
    %v768 = vpow.pop %v767
    %v769 = vadd.f32 %v768, 1.0
    %v770 = vrcp.pop %v769
    %v771 = vmul.f32 1.0, %v770
    %v772 = vmul.f32 %v764, %v751
    %v773 = vadd.f32 %v757, %v772
    %v774 = vtanh.pop %v773
    %v775 = vsub.f32 1.0, %v771
    %v776 = vmul.f32 %v775, %v774
    %v777 = vmul.f32 %v771, %v610
    %v778 = vadd.f32 %v776, %v777
    %s779 = scalar_lea.vmem [#allocation7], 24
    %780 = vst [vmem:[%s779] sm:$0xff] %v778
    %781 = vmatprep.subr.mxu0 %v92
    %782 = vmatpush1.msra.mxu0 %v91
    %783 = vmatprep.subr.mxu0 %v89
    %784 = vmatpush1.msra.mxu0 %v88
    %785 = vmatprep.subr.mxu0 %v86
    %786 = vmatpush1.msra.mxu0 %v85
    %787 = vmatprep.subr.mxu0 %v83
    %788 = vmatpush1.msra.mxu0 %v82
    %789 = vmatprep.subr.mxu0 %v80
    %790 = vmatpush1.msra.mxu0 %v79
    %791 = vmatprep.subr.mxu0 %v77
    %792 = vmatpush1.msra.mxu0 %v76
    %793 = vmatprep.subr.mxu0 %v74
    %794 = vmatpush1.msra.mxu0 %v73
    %795 = vmatprep.subr.mxu0 %v71
    %796 = vmatpush1.msra.mxu0 %v70
    %797 = vmatprep.subr.mxu0 %v68
    %798 = vmatpush1.msra.mxu0 %v67
    %799 = vmatprep.subr.mxu0 %v65
    %800 = vmatpush1.msra.mxu0 %v64
    %801 = vmatprep.subr.mxu0 %v62
    %802 = vmatpush1.msra.mxu0 %v61
    %803 = vmatprep.subr.mxu0 %v59
    %804 = vmatpush1.msra.mxu0 %v58
    %805 = vmatprep.subr.mxu0 %v56
    %806 = vmatpush1.msra.mxu0 %v55
    %807 = vmatprep.subr.mxu0 %v53
    %808 = vmatpush1.msra.mxu0 %v52
    %809 = vmatprep.subr.mxu0 %v50
    %810 = vmatpush1.msra.mxu0 %v49
    %811 = vmatprep.subr.mxu0 %v47
    %812 = vmatpush1.msra.mxu0 %v46
    %813 = vmatprep.subr.mxu0 0.0
    %814 = vmatpush2.msra.mxu0 0.0
    %815 = vmatprep.subr.mxu0 0.0
    %816 = vmatpush2.msra.mxu0 0.0
    %817 = vmatprep.subr.mxu0 0.0
    %818 = vmatpush2.msra.mxu0 0.0
    %819 = vmatprep.subr.mxu0 0.0
    %820 = vmatpush2.msra.mxu0 0.0
    %821 = vmatprep.subr.mxu0 0.0
    %822 = vmatpush2.msra.mxu0 0.0
    %823 = vmatprep.subr.mxu0 0.0
    %824 = vmatpush2.msra.mxu0 0.0
    %825 = vmatprep.subr.mxu0 0.0
    %826 = vmatpush2.msra.mxu0 0.0
    %827 = vmatprep.subr.mxu0 0.0
    %828 = vmatpush2.msra.mxu0 0.0
    %829 = vmatprep.subr.mxu0 0.0
    %830 = vmatpush2.msra.mxu0 0.0
    %831 = vmatprep.subr.mxu0 0.0
    %832 = vmatpush2.msra.mxu0 0.0
    %833 = vmatprep.subr.mxu0 0.0
    %834 = vmatpush2.msra.mxu0 0.0
    %835 = vmatprep.subr.mxu0 0.0
    %836 = vmatpush2.msra.mxu0 0.0
    %837 = vmatprep.subr.mxu0 0.0
    %838 = vmatpush2.msra.mxu0 0.0
    %839 = vmatprep.subr.mxu0 0.0
    %840 = vmatpush2.msra.mxu0 0.0
    %841 = vmatprep.subr.mxu0 0.0
    %842 = vmatpush2.msra.mxu0 0.0
    %843 = vmatprep.subr.mxu0 0.0
    %844 = vmatpush2.msra.mxu0 0.0
    %845 = vmatprep.mubr.f32.mxu0 0.0
    %846 = vmatmul.mubr.f32.gmra.mxu0 %v778
    %v847 = vpop.f32.mrf.mxu0
    %v848 = vadd.f32 %v99, %v847
    %v849 = vpop.f32.mrf.mxu0
    %v850 = vadd.f32 %v103, %v849
    %851 = vdwg.mxu0
    %852 = vmatprep.subr.mxu0 0.0
    %853 = vmatpush1.msra.mxu0 %v93
    %854 = vmatprep.subr.mxu0 0.0
    %855 = vmatpush1.msra.mxu0 %v90
    %856 = vmatprep.subr.mxu0 0.0
    %857 = vmatpush1.msra.mxu0 %v87
    %858 = vmatprep.subr.mxu0 0.0
    %859 = vmatpush1.msra.mxu0 %v84
    %860 = vmatprep.subr.mxu0 0.0
    %861 = vmatpush1.msra.mxu0 %v81
    %862 = vmatprep.subr.mxu0 0.0
    %863 = vmatpush1.msra.mxu0 %v78
    %864 = vmatprep.subr.mxu0 0.0
    %865 = vmatpush1.msra.mxu0 %v75
    %866 = vmatprep.subr.mxu0 0.0
    %867 = vmatpush1.msra.mxu0 %v72
    %868 = vmatprep.subr.mxu0 0.0
    %869 = vmatpush1.msra.mxu0 %v69
    %870 = vmatprep.subr.mxu0 0.0
    %871 = vmatpush1.msra.mxu0 %v66
    %872 = vmatprep.subr.mxu0 0.0
    %873 = vmatpush1.msra.mxu0 %v63
    %874 = vmatprep.subr.mxu0 0.0
    %875 = vmatpush1.msra.mxu0 %v60
    %876 = vmatprep.subr.mxu0 0.0
    %877 = vmatpush1.msra.mxu0 %v57
    %878 = vmatprep.subr.mxu0 0.0
    %879 = vmatpush1.msra.mxu0 %v54
    %880 = vmatprep.subr.mxu0 0.0
    %881 = vmatpush1.msra.mxu0 %v51
    %882 = vmatprep.subr.mxu0 0.0
    %883 = vmatpush1.msra.mxu0 %v48
    %884 = vmatprep.subr.mxu0 0.0
    %885 = vmatpush2.msra.mxu0 0.0
    %886 = vmatprep.subr.mxu0 0.0
    %887 = vmatpush2.msra.mxu0 0.0
    %888 = vmatprep.subr.mxu0 0.0
    %889 = vmatpush2.msra.mxu0 0.0
    %890 = vmatprep.subr.mxu0 0.0
    %891 = vmatpush2.msra.mxu0 0.0
    %892 = vmatprep.subr.mxu0 0.0
    %893 = vmatpush2.msra.mxu0 0.0
    %894 = vmatprep.subr.mxu0 0.0
    %895 = vmatpush2.msra.mxu0 0.0
    %896 = vmatprep.subr.mxu0 0.0
    %897 = vmatpush2.msra.mxu0 0.0
    %898 = vmatprep.subr.mxu0 0.0
    %899 = vmatpush2.msra.mxu0 0.0
    %900 = vmatprep.subr.mxu0 0.0
    %901 = vmatpush2.msra.mxu0 0.0
    %902 = vmatprep.subr.mxu0 0.0
    %903 = vmatpush2.msra.mxu0 0.0
    %904 = vmatprep.subr.mxu0 0.0
    %905 = vmatpush2.msra.mxu0 0.0
    %906 = vmatprep.subr.mxu0 0.0
    %907 = vmatpush2.msra.mxu0 0.0
    %908 = vmatprep.subr.mxu0 0.0
    %909 = vmatpush2.msra.mxu0 0.0
    %910 = vmatprep.subr.mxu0 0.0
    %911 = vmatpush2.msra.mxu0 0.0
    %912 = vmatprep.subr.mxu0 0.0
    %913 = vmatpush2.msra.mxu0 0.0
    %914 = vmatprep.subr.mxu0 0.0
    %915 = vmatpush2.msra.mxu0 0.0
    %916 = vmatprep.mubr.f32.mxu0 0.0
    %917 = vmatmul.mubr.f32.gmra.mxu0 %v778
    %v918 = vpop.f32.mrf.mxu0
    %v919 = vadd.f32 %v107, %v918
    %v920 = vpop.f32.mrf.mxu0
    %921 = vdwg.mxu0
    %s922 = scalar_lea.vmem [#allocation2], 96
    %v923 = vld [vmem:[%s922] sm:$0xff]
    %v924 = vld [vmem:[%s922 + $0x8] sm:$0xff]
    %v925 = vld [vmem:[%s922 + $0x10] sm:$0xff]
    %v926 = vadd.f32 %v923, %v848
    %v927 = vxor.u32 %v926, 2147483648
    %v928 = vmul.f32 %v927, 1.442695
    %v929 = vpow.pop %v928
    %v930 = vadd.f32 %v929, 1.0
    %v931 = vrcp.pop %v930
    %v932 = vmul.f32 1.0, %v931
    %v933 = vadd.f32 %v924, %v850
    %v934 = vxor.u32 %v933, 2147483648
    %v935 = vmul.f32 %v934, 1.442695
    %v936 = vpow.pop %v935
    %v937 = vadd.f32 %v936, 1.0
    %v938 = vrcp.pop %v937
    %v939 = vmul.f32 1.0, %v938
    %v940 = vmul.f32 %v932, %v919
    %v941 = vadd.f32 %v925, %v940
    %v942 = vtanh.pop %v941
    %v943 = vsub.f32 1.0, %v939
    %v944 = vmul.f32 %v943, %v942
    %v945 = vmul.f32 %v939, %v778
    %v946 = vadd.f32 %v944, %v945
    %s947 = scalar_lea.vmem [#allocation7], 32
    %948 = vst [vmem:[%s947] sm:$0xff] %v946
    %949 = vmatprep.subr.mxu0 %v92
    %950 = vmatpush1.msra.mxu0 %v91
    %951 = vmatprep.subr.mxu0 %v89
    %952 = vmatpush1.msra.mxu0 %v88
    %953 = vmatprep.subr.mxu0 %v86
    %954 = vmatpush1.msra.mxu0 %v85
    %955 = vmatprep.subr.mxu0 %v83
    %956 = vmatpush1.msra.mxu0 %v82
    %957 = vmatprep.subr.mxu0 %v80
    %958 = vmatpush1.msra.mxu0 %v79
    %959 = vmatprep.subr.mxu0 %v77
    %960 = vmatpush1.msra.mxu0 %v76
    %961 = vmatprep.subr.mxu0 %v74
    %962 = vmatpush1.msra.mxu0 %v73
    %963 = vmatprep.subr.mxu0 %v71
    %964 = vmatpush1.msra.mxu0 %v70
    %965 = vmatprep.subr.mxu0 %v68
    %966 = vmatpush1.msra.mxu0 %v67
    %967 = vmatprep.subr.mxu0 %v65
    %968 = vmatpush1.msra.mxu0 %v64
    %969 = vmatprep.subr.mxu0 %v62
    %970 = vmatpush1.msra.mxu0 %v61
    %971 = vmatprep.subr.mxu0 %v59
    %972 = vmatpush1.msra.mxu0 %v58
    %973 = vmatprep.subr.mxu0 %v56
    %974 = vmatpush1.msra.mxu0 %v55
    %975 = vmatprep.subr.mxu0 %v53
    %976 = vmatpush1.msra.mxu0 %v52
    %977 = vmatprep.subr.mxu0 %v50
    %978 = vmatpush1.msra.mxu0 %v49
    %979 = vmatprep.subr.mxu0 %v47
    %980 = vmatpush1.msra.mxu0 %v46
    %981 = vmatprep.subr.mxu0 0.0
    %982 = vmatpush2.msra.mxu0 0.0
    %983 = vmatprep.subr.mxu0 0.0
    %984 = vmatpush2.msra.mxu0 0.0
    %985 = vmatprep.subr.mxu0 0.0
    %986 = vmatpush2.msra.mxu0 0.0
    %987 = vmatprep.subr.mxu0 0.0
    %988 = vmatpush2.msra.mxu0 0.0
    %989 = vmatprep.subr.mxu0 0.0
    %990 = vmatpush2.msra.mxu0 0.0
    %991 = vmatprep.subr.mxu0 0.0
    %992 = vmatpush2.msra.mxu0 0.0
    %993 = vmatprep.subr.mxu0 0.0
    %994 = vmatpush2.msra.mxu0 0.0
    %995 = vmatprep.subr.mxu0 0.0
    %996 = vmatpush2.msra.mxu0 0.0
    %997 = vmatprep.subr.mxu0 0.0
    %998 = vmatpush2.msra.mxu0 0.0
    %999 = vmatprep.subr.mxu0 0.0
    %1000 = vmatpush2.msra.mxu0 0.0
    %1001 = vmatprep.subr.mxu0 0.0
    %1002 = vmatpush2.msra.mxu0 0.0
    %1003 = vmatprep.subr.mxu0 0.0
    %1004 = vmatpush2.msra.mxu0 0.0
    %1005 = vmatprep.subr.mxu0 0.0
    %1006 = vmatpush2.msra.mxu0 0.0
    %1007 = vmatprep.subr.mxu0 0.0
    %1008 = vmatpush2.msra.mxu0 0.0
    %1009 = vmatprep.subr.mxu0 0.0
    %1010 = vmatpush2.msra.mxu0 0.0
    %1011 = vmatprep.subr.mxu0 0.0
    %1012 = vmatpush2.msra.mxu0 0.0
    %1013 = vmatprep.mubr.f32.mxu0 0.0
    %1014 = vmatmul.mubr.f32.gmra.mxu0 %v946
    %v1015 = vpop.f32.mrf.mxu0
    %v1016 = vadd.f32 %v99, %v1015
    %v1017 = vpop.f32.mrf.mxu0
    %v1018 = vadd.f32 %v103, %v1017
    %1019 = vdwg.mxu0
    %1020 = vmatprep.subr.mxu0 0.0
    %1021 = vmatpush1.msra.mxu0 %v93
    %1022 = vmatprep.subr.mxu0 0.0
    %1023 = vmatpush1.msra.mxu0 %v90
    %1024 = vmatprep.subr.mxu0 0.0
    %1025 = vmatpush1.msra.mxu0 %v87
    %1026 = vmatprep.subr.mxu0 0.0
    %1027 = vmatpush1.msra.mxu0 %v84
    %1028 = vmatprep.subr.mxu0 0.0
    %1029 = vmatpush1.msra.mxu0 %v81
    %1030 = vmatprep.subr.mxu0 0.0
    %1031 = vmatpush1.msra.mxu0 %v78
    %1032 = vmatprep.subr.mxu0 0.0
    %1033 = vmatpush1.msra.mxu0 %v75
    %1034 = vmatprep.subr.mxu0 0.0
    %1035 = vmatpush1.msra.mxu0 %v72
    %1036 = vmatprep.subr.mxu0 0.0
    %1037 = vmatpush1.msra.mxu0 %v69
    %1038 = vmatprep.subr.mxu0 0.0
    %1039 = vmatpush1.msra.mxu0 %v66
    %1040 = vmatprep.subr.mxu0 0.0
    %1041 = vmatpush1.msra.mxu0 %v63
    %1042 = vmatprep.subr.mxu0 0.0
    %1043 = vmatpush1.msra.mxu0 %v60
    %1044 = vmatprep.subr.mxu0 0.0
    %1045 = vmatpush1.msra.mxu0 %v57
    %1046 = vmatprep.subr.mxu0 0.0
    %1047 = vmatpush1.msra.mxu0 %v54
    %1048 = vmatprep.subr.mxu0 0.0
    %1049 = vmatpush1.msra.mxu0 %v51
    %1050 = vmatprep.subr.mxu0 0.0
    %1051 = vmatpush1.msra.mxu0 %v48
    %1052 = vmatprep.subr.mxu0 0.0
    %1053 = vmatpush2.msra.mxu0 0.0
    %1054 = vmatprep.subr.mxu0 0.0
    %1055 = vmatpush2.msra.mxu0 0.0
    %1056 = vmatprep.subr.mxu0 0.0
    %1057 = vmatpush2.msra.mxu0 0.0
    %1058 = vmatprep.subr.mxu0 0.0
    %1059 = vmatpush2.msra.mxu0 0.0
    %1060 = vmatprep.subr.mxu0 0.0
    %1061 = vmatpush2.msra.mxu0 0.0
    %1062 = vmatprep.subr.mxu0 0.0
    %1063 = vmatpush2.msra.mxu0 0.0
    %1064 = vmatprep.subr.mxu0 0.0
    %1065 = vmatpush2.msra.mxu0 0.0
    %1066 = vmatprep.subr.mxu0 0.0
    %1067 = vmatpush2.msra.mxu0 0.0
    %1068 = vmatprep.subr.mxu0 0.0
    %1069 = vmatpush2.msra.mxu0 0.0
    %1070 = vmatprep.subr.mxu0 0.0
    %1071 = vmatpush2.msra.mxu0 0.0
    %1072 = vmatprep.subr.mxu0 0.0
    %1073 = vmatpush2.msra.mxu0 0.0
    %1074 = vmatprep.subr.mxu0 0.0
    %1075 = vmatpush2.msra.mxu0 0.0
    %1076 = vmatprep.subr.mxu0 0.0
    %1077 = vmatpush2.msra.mxu0 0.0
    %1078 = vmatprep.subr.mxu0 0.0
    %1079 = vmatpush2.msra.mxu0 0.0
    %1080 = vmatprep.subr.mxu0 0.0
    %1081 = vmatpush2.msra.mxu0 0.0
    %1082 = vmatprep.subr.mxu0 0.0
    %1083 = vmatpush2.msra.mxu0 0.0
    %1084 = vmatprep.mubr.f32.mxu0 0.0
    %1085 = vmatmul.mubr.f32.gmra.mxu0 %v946
    %v1086 = vpop.f32.mrf.mxu0
    %v1087 = vadd.f32 %v107, %v1086
    %v1088 = vpop.f32.mrf.mxu0
    %1089 = vdwg.mxu0
    %s1090 = scalar_lea.vmem [#allocation2], 120
    %v1091 = vld [vmem:[%s1090] sm:$0xff]
    %v1092 = vld [vmem:[%s1090 + $0x8] sm:$0xff]
    %v1093 = vld [vmem:[%s1090 + $0x10] sm:$0xff]
    %v1094 = vadd.f32 %v1091, %v1016
    %v1095 = vxor.u32 %v1094, 2147483648
    %v1096 = vmul.f32 %v1095, 1.442695
    %v1097 = vpow.pop %v1096
    %v1098 = vadd.f32 %v1097, 1.0
    %v1099 = vrcp.pop %v1098
    %v1100 = vmul.f32 1.0, %v1099
    %v1101 = vadd.f32 %v1092, %v1018
    %v1102 = vxor.u32 %v1101, 2147483648
    %v1103 = vmul.f32 %v1102, 1.442695
    %v1104 = vpow.pop %v1103
    %v1105 = vadd.f32 %v1104, 1.0
    %v1106 = vrcp.pop %v1105
    %v1107 = vmul.f32 1.0, %v1106
    %v1108 = vmul.f32 %v1100, %v1087
    %v1109 = vadd.f32 %v1093, %v1108
    %v1110 = vtanh.pop %v1109
    %v1111 = vsub.f32 1.0, %v1107
    %v1112 = vmul.f32 %v1111, %v1110
    %v1113 = vmul.f32 %v1107, %v946
    %v1114 = vadd.f32 %v1112, %v1113
    %s1115 = scalar_lea.vmem [#allocation7], 40
    %1116 = vst [vmem:[%s1115] sm:$0xff] %v1114
    %1117 = vmatprep.subr.mxu0 %v92
    %1118 = vmatpush1.msra.mxu0 %v91
    %1119 = vmatprep.subr.mxu0 %v89
    %1120 = vmatpush1.msra.mxu0 %v88
    %1121 = vmatprep.subr.mxu0 %v86
    %1122 = vmatpush1.msra.mxu0 %v85
    %1123 = vmatprep.subr.mxu0 %v83
    %1124 = vmatpush1.msra.mxu0 %v82
    %1125 = vmatprep.subr.mxu0 %v80
    %1126 = vmatpush1.msra.mxu0 %v79
    %1127 = vmatprep.subr.mxu0 %v77
    %1128 = vmatpush1.msra.mxu0 %v76
    %1129 = vmatprep.subr.mxu0 %v74
    %1130 = vmatpush1.msra.mxu0 %v73
    %1131 = vmatprep.subr.mxu0 %v71
    %1132 = vmatpush1.msra.mxu0 %v70
    %1133 = vmatprep.subr.mxu0 %v68
    %1134 = vmatpush1.msra.mxu0 %v67
    %1135 = vmatprep.subr.mxu0 %v65
    %1136 = vmatpush1.msra.mxu0 %v64
    %1137 = vmatprep.subr.mxu0 %v62
    %1138 = vmatpush1.msra.mxu0 %v61
    %1139 = vmatprep.subr.mxu0 %v59
    %1140 = vmatpush1.msra.mxu0 %v58
    %1141 = vmatprep.subr.mxu0 %v56
    %1142 = vmatpush1.msra.mxu0 %v55
    %1143 = vmatprep.subr.mxu0 %v53
    %1144 = vmatpush1.msra.mxu0 %v52
    %1145 = vmatprep.subr.mxu0 %v50
    %1146 = vmatpush1.msra.mxu0 %v49
    %1147 = vmatprep.subr.mxu0 %v47
    %1148 = vmatpush1.msra.mxu0 %v46
    %1149 = vmatprep.subr.mxu0 0.0
    %1150 = vmatpush2.msra.mxu0 0.0
    %1151 = vmatprep.subr.mxu0 0.0
    %1152 = vmatpush2.msra.mxu0 0.0
    %1153 = vmatprep.subr.mxu0 0.0
    %1154 = vmatpush2.msra.mxu0 0.0
    %1155 = vmatprep.subr.mxu0 0.0
    %1156 = vmatpush2.msra.mxu0 0.0
    %1157 = vmatprep.subr.mxu0 0.0
    %1158 = vmatpush2.msra.mxu0 0.0
    %1159 = vmatprep.subr.mxu0 0.0
    %1160 = vmatpush2.msra.mxu0 0.0
    %1161 = vmatprep.subr.mxu0 0.0
    %1162 = vmatpush2.msra.mxu0 0.0
    %1163 = vmatprep.subr.mxu0 0.0
    %1164 = vmatpush2.msra.mxu0 0.0
    %1165 = vmatprep.subr.mxu0 0.0
    %1166 = vmatpush2.msra.mxu0 0.0
    %1167 = vmatprep.subr.mxu0 0.0
    %1168 = vmatpush2.msra.mxu0 0.0
    %1169 = vmatprep.subr.mxu0 0.0
    %1170 = vmatpush2.msra.mxu0 0.0
    %1171 = vmatprep.subr.mxu0 0.0
    %1172 = vmatpush2.msra.mxu0 0.0
    %1173 = vmatprep.subr.mxu0 0.0
    %1174 = vmatpush2.msra.mxu0 0.0
    %1175 = vmatprep.subr.mxu0 0.0
    %1176 = vmatpush2.msra.mxu0 0.0
    %1177 = vmatprep.subr.mxu0 0.0
    %1178 = vmatpush2.msra.mxu0 0.0
    %1179 = vmatprep.subr.mxu0 0.0
    %1180 = vmatpush2.msra.mxu0 0.0
    %1181 = vmatprep.mubr.f32.mxu0 0.0
    %1182 = vmatmul.mubr.f32.gmra.mxu0 %v1114
    %v1183 = vpop.f32.mrf.mxu0
    %v1184 = vadd.f32 %v99, %v1183
    %v1185 = vpop.f32.mrf.mxu0
    %v1186 = vadd.f32 %v103, %v1185
    %1187 = vdwg.mxu0
    %1188 = vmatprep.subr.mxu0 0.0
    %1189 = vmatpush1.msra.mxu0 %v93
    %1190 = vmatprep.subr.mxu0 0.0
    %1191 = vmatpush1.msra.mxu0 %v90
    %1192 = vmatprep.subr.mxu0 0.0
    %1193 = vmatpush1.msra.mxu0 %v87
    %1194 = vmatprep.subr.mxu0 0.0
    %1195 = vmatpush1.msra.mxu0 %v84
    %1196 = vmatprep.subr.mxu0 0.0
    %1197 = vmatpush1.msra.mxu0 %v81
    %1198 = vmatprep.subr.mxu0 0.0
    %1199 = vmatpush1.msra.mxu0 %v78
    %1200 = vmatprep.subr.mxu0 0.0
    %1201 = vmatpush1.msra.mxu0 %v75
    %1202 = vmatprep.subr.mxu0 0.0
    %1203 = vmatpush1.msra.mxu0 %v72
    %1204 = vmatprep.subr.mxu0 0.0
    %1205 = vmatpush1.msra.mxu0 %v69
    %1206 = vmatprep.subr.mxu0 0.0
    %1207 = vmatpush1.msra.mxu0 %v66
    %1208 = vmatprep.subr.mxu0 0.0
    %1209 = vmatpush1.msra.mxu0 %v63
    %1210 = vmatprep.subr.mxu0 0.0
    %1211 = vmatpush1.msra.mxu0 %v60
    %1212 = vmatprep.subr.mxu0 0.0
    %1213 = vmatpush1.msra.mxu0 %v57
    %1214 = vmatprep.subr.mxu0 0.0
    %1215 = vmatpush1.msra.mxu0 %v54
    %1216 = vmatprep.subr.mxu0 0.0
    %1217 = vmatpush1.msra.mxu0 %v51
    %1218 = vmatprep.subr.mxu0 0.0
    %1219 = vmatpush1.msra.mxu0 %v48
    %1220 = vmatprep.subr.mxu0 0.0
    %1221 = vmatpush2.msra.mxu0 0.0
    %1222 = vmatprep.subr.mxu0 0.0
    %1223 = vmatpush2.msra.mxu0 0.0
    %1224 = vmatprep.subr.mxu0 0.0
    %1225 = vmatpush2.msra.mxu0 0.0
    %1226 = vmatprep.subr.mxu0 0.0
    %1227 = vmatpush2.msra.mxu0 0.0
    %1228 = vmatprep.subr.mxu0 0.0
    %1229 = vmatpush2.msra.mxu0 0.0
    %1230 = vmatprep.subr.mxu0 0.0
    %1231 = vmatpush2.msra.mxu0 0.0
    %1232 = vmatprep.subr.mxu0 0.0
    %1233 = vmatpush2.msra.mxu0 0.0
    %1234 = vmatprep.subr.mxu0 0.0
    %1235 = vmatpush2.msra.mxu0 0.0
    %1236 = vmatprep.subr.mxu0 0.0
    %1237 = vmatpush2.msra.mxu0 0.0
    %1238 = vmatprep.subr.mxu0 0.0
    %1239 = vmatpush2.msra.mxu0 0.0
    %1240 = vmatprep.subr.mxu0 0.0
    %1241 = vmatpush2.msra.mxu0 0.0
    %1242 = vmatprep.subr.mxu0 0.0
    %1243 = vmatpush2.msra.mxu0 0.0
    %1244 = vmatprep.subr.mxu0 0.0
    %1245 = vmatpush2.msra.mxu0 0.0
    %1246 = vmatprep.subr.mxu0 0.0
    %1247 = vmatpush2.msra.mxu0 0.0
    %1248 = vmatprep.subr.mxu0 0.0
    %1249 = vmatpush2.msra.mxu0 0.0
    %1250 = vmatprep.subr.mxu0 0.0
    %1251 = vmatpush2.msra.mxu0 0.0
    %1252 = vmatprep.mubr.f32.mxu0 0.0
    %1253 = vmatmul.mubr.f32.gmra.mxu0 %v1114
    %v1254 = vpop.f32.mrf.mxu0
    %v1255 = vadd.f32 %v107, %v1254
    %v1256 = vpop.f32.mrf.mxu0
    %1257 = vdwg.mxu0
    %s1258 = scalar_lea.vmem [#allocation2], 144
    %v1259 = vld [vmem:[%s1258] sm:$0xff]
    %v1260 = vld [vmem:[%s1258 + $0x8] sm:$0xff]
    %v1261 = vld [vmem:[%s1258 + $0x10] sm:$0xff]
    %v1262 = vadd.f32 %v1259, %v1184
    %v1263 = vxor.u32 %v1262, 2147483648
    %v1264 = vmul.f32 %v1263, 1.442695
    %v1265 = vpow.pop %v1264
    %v1266 = vadd.f32 %v1265, 1.0
    %v1267 = vrcp.pop %v1266
    %v1268 = vmul.f32 1.0, %v1267
    %v1269 = vadd.f32 %v1260, %v1186
    %v1270 = vxor.u32 %v1269, 2147483648
    %v1271 = vmul.f32 %v1270, 1.442695
    %v1272 = vpow.pop %v1271
    %v1273 = vadd.f32 %v1272, 1.0
    %v1274 = vrcp.pop %v1273
    %v1275 = vmul.f32 1.0, %v1274
    %v1276 = vmul.f32 %v1268, %v1255
    %v1277 = vadd.f32 %v1261, %v1276
    %v1278 = vtanh.pop %v1277
    %v1279 = vsub.f32 1.0, %v1275
    %v1280 = vmul.f32 %v1279, %v1278
    %v1281 = vmul.f32 %v1275, %v1114
    %v1282 = vadd.f32 %v1280, %v1281
    %s1283 = scalar_lea.vmem [#allocation7], 48
    %1284 = vst [vmem:[%s1283] sm:$0xff] %v1282
    %1285 = vmatprep.subr.mxu0 %v92
    %1286 = vmatpush1.msra.mxu0 %v91
    %1287 = vmatprep.subr.mxu0 %v89
    %1288 = vmatpush1.msra.mxu0 %v88
    %1289 = vmatprep.subr.mxu0 %v86
    %1290 = vmatpush1.msra.mxu0 %v85
    %1291 = vmatprep.subr.mxu0 %v83
    %1292 = vmatpush1.msra.mxu0 %v82
    %1293 = vmatprep.subr.mxu0 %v80
    %1294 = vmatpush1.msra.mxu0 %v79
    %1295 = vmatprep.subr.mxu0 %v77
    %1296 = vmatpush1.msra.mxu0 %v76
    %1297 = vmatprep.subr.mxu0 %v74
    %1298 = vmatpush1.msra.mxu0 %v73
    %1299 = vmatprep.subr.mxu0 %v71
    %1300 = vmatpush1.msra.mxu0 %v70
    %1301 = vmatprep.subr.mxu0 %v68
    %1302 = vmatpush1.msra.mxu0 %v67
    %1303 = vmatprep.subr.mxu0 %v65
    %1304 = vmatpush1.msra.mxu0 %v64
    %1305 = vmatprep.subr.mxu0 %v62
    %1306 = vmatpush1.msra.mxu0 %v61
    %1307 = vmatprep.subr.mxu0 %v59
    %1308 = vmatpush1.msra.mxu0 %v58
    %1309 = vmatprep.subr.mxu0 %v56
    %1310 = vmatpush1.msra.mxu0 %v55
    %1311 = vmatprep.subr.mxu0 %v53
    %1312 = vmatpush1.msra.mxu0 %v52
    %1313 = vmatprep.subr.mxu0 %v50
    %1314 = vmatpush1.msra.mxu0 %v49
    %1315 = vmatprep.subr.mxu0 %v47
    %1316 = vmatpush1.msra.mxu0 %v46
    %1317 = vmatprep.subr.mxu0 0.0
    %1318 = vmatpush2.msra.mxu0 0.0
    %1319 = vmatprep.subr.mxu0 0.0
    %1320 = vmatpush2.msra.mxu0 0.0
    %1321 = vmatprep.subr.mxu0 0.0
    %1322 = vmatpush2.msra.mxu0 0.0
    %1323 = vmatprep.subr.mxu0 0.0
    %1324 = vmatpush2.msra.mxu0 0.0
    %1325 = vmatprep.subr.mxu0 0.0
    %1326 = vmatpush2.msra.mxu0 0.0
    %1327 = vmatprep.subr.mxu0 0.0
    %1328 = vmatpush2.msra.mxu0 0.0
    %1329 = vmatprep.subr.mxu0 0.0
    %1330 = vmatpush2.msra.mxu0 0.0
    %1331 = vmatprep.subr.mxu0 0.0
    %1332 = vmatpush2.msra.mxu0 0.0
    %1333 = vmatprep.subr.mxu0 0.0
    %1334 = vmatpush2.msra.mxu0 0.0
    %1335 = vmatprep.subr.mxu0 0.0
    %1336 = vmatpush2.msra.mxu0 0.0
    %1337 = vmatprep.subr.mxu0 0.0
    %1338 = vmatpush2.msra.mxu0 0.0
    %1339 = vmatprep.subr.mxu0 0.0
    %1340 = vmatpush2.msra.mxu0 0.0
    %1341 = vmatprep.subr.mxu0 0.0
    %1342 = vmatpush2.msra.mxu0 0.0
    %1343 = vmatprep.subr.mxu0 0.0
    %1344 = vmatpush2.msra.mxu0 0.0
    %1345 = vmatprep.subr.mxu0 0.0
    %1346 = vmatpush2.msra.mxu0 0.0
    %1347 = vmatprep.subr.mxu0 0.0
    %1348 = vmatpush2.msra.mxu0 0.0
    %1349 = vmatprep.mubr.f32.mxu0 0.0
    %1350 = vmatmul.mubr.f32.gmra.mxu0 %v1282
    %v1351 = vpop.f32.mrf.mxu0
    %v1352 = vadd.f32 %v99, %v1351
    %v1353 = vpop.f32.mrf.mxu0
    %v1354 = vadd.f32 %v103, %v1353
    %1355 = vdwg.mxu0
    %1356 = vmatprep.subr.mxu0 0.0
    %1357 = vmatpush1.msra.mxu0 %v93
    %1358 = vmatprep.subr.mxu0 0.0
    %1359 = vmatpush1.msra.mxu0 %v90
    %1360 = vmatprep.subr.mxu0 0.0
    %1361 = vmatpush1.msra.mxu0 %v87
    %1362 = vmatprep.subr.mxu0 0.0
    %1363 = vmatpush1.msra.mxu0 %v84
    %1364 = vmatprep.subr.mxu0 0.0
    %1365 = vmatpush1.msra.mxu0 %v81
    %1366 = vmatprep.subr.mxu0 0.0
    %1367 = vmatpush1.msra.mxu0 %v78
    %1368 = vmatprep.subr.mxu0 0.0
    %1369 = vmatpush1.msra.mxu0 %v75
    %1370 = vmatprep.subr.mxu0 0.0
    %1371 = vmatpush1.msra.mxu0 %v72
    %1372 = vmatprep.subr.mxu0 0.0
    %1373 = vmatpush1.msra.mxu0 %v69
    %1374 = vmatprep.subr.mxu0 0.0
    %1375 = vmatpush1.msra.mxu0 %v66
    %1376 = vmatprep.subr.mxu0 0.0
    %1377 = vmatpush1.msra.mxu0 %v63
    %1378 = vmatprep.subr.mxu0 0.0
    %1379 = vmatpush1.msra.mxu0 %v60
    %1380 = vmatprep.subr.mxu0 0.0
    %1381 = vmatpush1.msra.mxu0 %v57
    %1382 = vmatprep.subr.mxu0 0.0
    %1383 = vmatpush1.msra.mxu0 %v54
    %1384 = vmatprep.subr.mxu0 0.0
    %1385 = vmatpush1.msra.mxu0 %v51
    %1386 = vmatprep.subr.mxu0 0.0
    %1387 = vmatpush1.msra.mxu0 %v48
    %1388 = vmatprep.subr.mxu0 0.0
    %1389 = vmatpush2.msra.mxu0 0.0
    %1390 = vmatprep.subr.mxu0 0.0
    %1391 = vmatpush2.msra.mxu0 0.0
    %1392 = vmatprep.subr.mxu0 0.0
    %1393 = vmatpush2.msra.mxu0 0.0
    %1394 = vmatprep.subr.mxu0 0.0
    %1395 = vmatpush2.msra.mxu0 0.0
    %1396 = vmatprep.subr.mxu0 0.0
    %1397 = vmatpush2.msra.mxu0 0.0
    %1398 = vmatprep.subr.mxu0 0.0
    %1399 = vmatpush2.msra.mxu0 0.0
    %1400 = vmatprep.subr.mxu0 0.0
    %1401 = vmatpush2.msra.mxu0 0.0
    %1402 = vmatprep.subr.mxu0 0.0
    %1403 = vmatpush2.msra.mxu0 0.0
    %1404 = vmatprep.subr.mxu0 0.0
    %1405 = vmatpush2.msra.mxu0 0.0
    %1406 = vmatprep.subr.mxu0 0.0
    %1407 = vmatpush2.msra.mxu0 0.0
    %1408 = vmatprep.subr.mxu0 0.0
    %1409 = vmatpush2.msra.mxu0 0.0
    %1410 = vmatprep.subr.mxu0 0.0
    %1411 = vmatpush2.msra.mxu0 0.0
    %1412 = vmatprep.subr.mxu0 0.0
    %1413 = vmatpush2.msra.mxu0 0.0
    %1414 = vmatprep.subr.mxu0 0.0
    %1415 = vmatpush2.msra.mxu0 0.0
    %1416 = vmatprep.subr.mxu0 0.0
    %1417 = vmatpush2.msra.mxu0 0.0
    %1418 = vmatprep.subr.mxu0 0.0
    %1419 = vmatpush2.msra.mxu0 0.0
    %1420 = vmatprep.mubr.f32.mxu0 0.0
    %1421 = vmatmul.mubr.f32.gmra.mxu0 %v1282
    %v1422 = vpop.f32.mrf.mxu0
    %v1423 = vadd.f32 %v107, %v1422
    %v1424 = vpop.f32.mrf.mxu0
    %1425 = vdwg.mxu0
    %s1426 = scalar_lea.vmem [#allocation2], 168
    %v1427 = vld [vmem:[%s1426] sm:$0xff]
    %v1428 = vld [vmem:[%s1426 + $0x8] sm:$0xff]
    %v1429 = vld [vmem:[%s1426 + $0x10] sm:$0xff]
    %v1430 = vadd.f32 %v1427, %v1352
    %v1431 = vxor.u32 %v1430, 2147483648
    %v1432 = vmul.f32 %v1431, 1.442695
    %v1433 = vpow.pop %v1432
    %v1434 = vadd.f32 %v1433, 1.0
    %v1435 = vrcp.pop %v1434
    %v1436 = vmul.f32 1.0, %v1435
    %v1437 = vadd.f32 %v1428, %v1354
    %v1438 = vxor.u32 %v1437, 2147483648
    %v1439 = vmul.f32 %v1438, 1.442695
    %v1440 = vpow.pop %v1439
    %v1441 = vadd.f32 %v1440, 1.0
    %v1442 = vrcp.pop %v1441
    %v1443 = vmul.f32 1.0, %v1442
    %v1444 = vmul.f32 %v1436, %v1423
    %v1445 = vadd.f32 %v1429, %v1444
    %v1446 = vtanh.pop %v1445
    %v1447 = vsub.f32 1.0, %v1443
    %v1448 = vmul.f32 %v1447, %v1446
    %v1449 = vmul.f32 %v1443, %v1282
    %v1450 = vadd.f32 %v1448, %v1449
    %s1451 = scalar_lea.vmem [#allocation7], 56
    %1452 = vst [vmem:[%s1451] sm:$0xff] %v1450
    %1453 = vst [vmem:[#allocation8] sm:$0xff] %v1450
    // Predicated region
    $region22: #{tpu_custom_call.1} parent=1 // pred_check
      _
    $region23: #{tpu_custom_call.1} parent=1 // pred_check_branch
      %1455 = sbr.rel (0) target = $region25
    $region24: #{tpu_custom_call.1} parent=1 // pred_region
      %s1457 = ssub.s32 1024, 1024
      %1458 = vsyncadd [#allocation4], %s1457
      %s1459 = sshll.u32 [#allocation7], 4
      %s1460 = int_to_ptr.vmem [resolvable:$true] %s1459
      %1465 = dma.vmem_to_hbm [thread:$0]  %s1460, 1024, %s3, [#allocation4], 128, 128, 8
    $region25: #{tpu_custom_call.1} parent=1 // pred_fallthru
      _
    // Predicated region
    $region26: #{tpu_custom_call.1} parent=1 // pred_check
      _
    $region27: #{tpu_custom_call.1} parent=1 // pred_check_branch
      %1467 = sbr.rel (0) target = $region29
    $region28: #{tpu_custom_call.1} parent=1 // pred_region
      %s1469 = ssub.s32 128, 128
      %1470 = vsyncadd [#allocation9], %s1469
      %s1472 = sshll.u32 [#allocation8], 4
      %s1473 = int_to_ptr.vmem [resolvable:$true] %s1472
      %1475 = dma.vmem_to_hbm [thread:$0]  %s1473, 128, %s4, [#allocation9]
    $region29: #{tpu_custom_call.1} parent=1 // pred_fallthru
      _
    // Predicated region
    $region30: #{tpu_custom_call.1} parent=1 // pred_check
      _
    $region31: #{tpu_custom_call.1} parent=1 // pred_check_branch
      %1477 = sbr.rel (0) target = $region33
    $region32: #{tpu_custom_call.1} parent=1 // pred_region
      %1478 = dma.done [#allocation4], 1024
    $region33: #{tpu_custom_call.1} parent=1 // pred_fallthru
      _
    // Predicated region
    $region34: #{tpu_custom_call.1} parent=1 // pred_check
      _
    $region35: #{tpu_custom_call.1} parent=1 // pred_check_branch
      %1480 = sbr.rel (0) target = $region37
    $region36: #{tpu_custom_call.1} parent=1 // pred_region
      %1481 = dma.done [#allocation9], 128
    $region37: #{tpu_custom_call.1} parent=1 // pred_fallthru
      _
    %1482 = vsyncpa [#allocation3], 1
    %1483 = vsyncpa [#allocation6], 1
    %1484 = vsyncpa [#allocation4], 1
    %1485 = vsyncpa [#allocation9], 1

</llo_original>
